<compile_context>
chip_gen: v6e
topology: v6e:2x2x1
jax: 0.10.0
libtpu: 0.0.40
codegen_flags: <defaults>
</compile_context>

<pallas_src>
import math
import functools

import jax
import jax.numpy as jnp
from jax.experimental import pallas as pl
from jax.experimental.pallas import tpu as pltpu


_NEG_INF = float("-inf")


# ----------------------------------------------------------------------------- helpers
def _round_up(x, m):
    return ((x + m - 1) // m) * m


@functools.lru_cache(maxsize=None)
def _vmem_capacity_bytes():
    try:
        return int(pltpu.get_tpu_info().vmem_capacity_bytes)
    except Exception:
        return 64 * 1024 * 1024            # conservative fallback (v7x per-TC VMEM)


def _vmem_budget_bytes():
    # leave headroom for compiler-internal scratch / revolving buffers
    return max(_vmem_capacity_bytes() - (24 << 20), 24 << 20)


def _erf(x):
    # Abramowitz & Stegun 7.1.26 rational approximation, |err| <= 1.5e-7.  Matches
    # PyTorch's exact (erf-based) nn.GELU to ~1e-7 and lowers cleanly in Mosaic.
    a1, a2, a3, a4, a5 = 0.254829592, -0.284496736, 1.421413741, -1.453152027, 1.061405429
    p = 0.3275911
    s = jnp.where(x >= 0.0, 1.0, -1.0)
    z = jnp.abs(x)
    t = 1.0 / (1.0 + p * z)
    poly = ((((a5 * t + a4) * t + a3) * t + a2) * t + a1) * t
    return s * (1.0 - poly * jnp.exp(-z * z))


def _gelu(x):
    return 0.5 * x * (1.0 + _erf(x * 0.7071067811865476))


def _pick_tm(n, h, budget):
    # Larger token tiles amortize expert-weight streaming (v5e) and the ~0.35us/step grid
    # overhead; prefer an even tile count so v7x can split the "parallel" axis across both
    # TensorCores; cap by the resident-tile VMEM footprint (x bf16 + out f32 + routing wts).
    def resident(tm):
        return 2 * tm * h * 2 + 2 * tm * h * 4 + 2 * tm * 128 * 4
    cands = [tm for tm in (1024, 512, 256, 128) if n % tm == 0]
    for tm in cands:
        if (n // tm) % 2 == 0 and resident(tm) <= budget // 2:
            return tm
    for tm in cands:
        if resident(tm) <= budget // 2:
            return tm
    return cands[-1] if cands else n


# ----------------------------------------------------------------------------- parameter prep
def prepare_params(p, *, num_groups, num_experts):
    """One-time prep: fused bf16 router slab (conf-hidden | routing lanes) + bf16 expert weights."""
    h, h2 = p["wc1"].shape
    g, e = num_groups, num_experts
    h2p = _round_up(h2, 128)                 # conf-hidden lanes, 128-aligned
    rp = _round_up(g + e + 1, 128)           # [group | expert | conf] lanes, their own 128 block

    wp = h2p + rp
    w_cat = jnp.zeros((h, wp), jnp.float32)
    w_cat = w_cat.at[:, :h2].set(p["wc1"])
    w_cat = w_cat.at[:, h2p:h2p + g].set(p["wg"])
    w_cat = w_cat.at[:, h2p + g:h2p + g + e].set(p["we_cat"])
    b_cat = jnp.zeros((1, wp), jnp.float32)
    b_cat = b_cat.at[:, :h2].set(p["bc1"])
    b_cat = b_cat.at[:, h2p:h2p + g].set(p["bg"])
    b_cat = b_cat.at[:, h2p + g:h2p + g + e].set(p["be_cat"])
    wc2_row = jnp.zeros((1, h2p), jnp.float32).at[:, :h2].set(p["wc2"][:, 0])

    prep = dict(p)
    prep.update({
        "router_w": w_cat.astype(jnp.bfloat16),   # bf16 operands, f32 MXU accumulation in-kernel
        "router_b": b_cat,
        "router_wc2": wc2_row,
        "router_bc2": p["bc2"].reshape(1, 1),
        "w1_bf": p["w1"].astype(jnp.bfloat16),
        "w2_bf": p["w2"].astype(jnp.bfloat16),
    })
    return prep


# ----------------------------------------------------------------------------- kernel 1: fused router
def router_kernel(x_ref, w_ref, b_ref, wc2_ref, bc2_ref, out_ref, *, h2p, g, e):
    # one fused lane-dense bf16 matmul for all router heads, f32 accumulation
    z = jnp.dot(x_ref[...], w_ref[...], preferred_element_type=jnp.float32) + b_ref[...]
    zc = z[:, :h2p]            # confidence-estimator hidden slab   [tm, h2p]   (128-aligned slice)
    zr = z[:, h2p:]            # routing slab [group|expert|conf]   [tm, rp]    (narrow, ~128 lanes)

    # confidence head: GELU + VPU multiply + lane reduce (wc2 zero-padded outside [0, h2))
    clogit = jnp.sum(_gelu(zc) * wc2_ref[...], axis=-1, keepdims=True) + bc2_ref[...]
    conf = jax.nn.sigmoid(clogit)                                               # [tm, 1]

    col = jax.lax.broadcasted_iota(jnp.int32, zr.shape, 1)                      # narrow slab only

    # group softmax over lanes [0, g), max-stabilized
    gz = jnp.where(col < g, zr, _NEG_INF)
    gz = gz - jnp.max(gz, axis=-1, keepdims=True)
    gex = jnp.exp(gz)                                                           # 0 outside group lanes
    gprob = gex / jnp.sum(gex, axis=-1, keepdims=True)

    # per-group expert softmax over lanes [g + gi*epg, g + (gi+1)*epg), stabilized per group
    epg = e // g
    eprob = jnp.zeros_like(zr)
    for gi in range(g):                                                         # g is small & static
        lo = g + gi * epg
        m = jnp.logical_and(col >= lo, col < lo + epg)
        ez = jnp.where(m, zr, _NEG_INF)
        ez = ez - jnp.max(ez, axis=-1, keepdims=True)
        ee = jnp.exp(ez)
        eprob = eprob + ee / jnp.sum(ee, axis=-1, keepdims=True)

    # single narrow lane-dense output block: [gprob | eprob | conf] on disjoint lanes
    out_ref[...] = gprob + eprob + jnp.where(col == g + e, conf, 0.0)


def run_router(x_bf, prep, *, tm, num_groups, num_experts):
    n, h = x_bf.shape
    g, e = num_groups, num_experts
    w_cat, b_cat = prep["router_w"], prep["router_b"]
    wc2, bc2 = prep["router_wc2"], prep["router_bc2"]
    h2p = wc2.shape[1]
    wp = w_cat.shape[1]
    rp = wp - h2p

    # explicit VMEM budget from actual block sizes (weight slab is single-buffered)
    need = (2 * tm * h * 2                     # x tile, bf16, double-buffered
            + h * wp * 2                       # fused weight slab, bf16, Buffered(1)
            + 2 * wp * 4 + 2 * h2p * 4 + 8     # small bias / wc2 vectors
            + 2 * tm * rp * 4)                 # narrow output slab, f32, double-buffered
    capacity = _vmem_capacity_bytes()
    vmem_limit = int(min(capacity - (4 << 20), max(32 << 20, need + (16 << 20))))

    slab = pl.pallas_call(
        functools.partial(router_kernel, h2p=h2p, g=g, e=e),
        out_shape=jax.ShapeDtypeStruct((n, rp), jnp.float32),
        grid=(n // tm,),
        in_specs=[pl.BlockSpec((tm, h), lambda i: (i, 0)),
                  pl.BlockSpec((h, wp), lambda i: (0, 0),
                               pipeline_mode=pl.Buffered(1)),   # constant index -> keep resident
                  pl.BlockSpec((1, wp), lambda i: (0, 0)),
                  pl.BlockSpec((1, h2p), lambda i: (0, 0)),
                  pl.BlockSpec((1, 1), lambda i: (0, 0))],
        out_specs=pl.BlockSpec((tm, rp), lambda i: (i, 0)),
        compiler_params=pltpu.CompilerParams(
            dimension_semantics=("parallel",), vmem_limit_bytes=vmem_limit),
    )(x_bf, w_cat, b_cat, wc2, bc2)

    conf = slab[:, g + e:g + e + 1]
    gprobs = slab[:, :g]
    eprobs = slab[:, g:g + e]
    return conf, gprobs, eprobs


# ----------------------------------------------------------------------------- kernel 2: sparse expert combine
def moe_expert_kernel(flags_ref, fetch_ref, x_ref, wall_ref,
                      w1_ref, b1_ref, w2_ref, b2_ref, out_ref, *, e):
    i = pl.program_id(0)      # token tile
    k = pl.program_id(1)      # expert
    fi = pl.program_id(2)     # FFN chunk

    @pl.when(jnp.logical_and(k == 0, fi == 0))
    def _init():
        out_ref[...] = jnp.zeros_like(out_ref)     # accumulate directly into the resident out tile

    @pl.when(flags_ref[i * e + k] != 0)            # zero-weight experts: skip compute entirely
    def _compute():
        x = x_ref[...]                                                          # bf16 [tm, H]
        hid = jnp.dot(x, w1_ref[0], preferred_element_type=jnp.float32) + b1_ref[0]
        hid = _gelu(hid)                                                        # f32 [tm, tf]
        y = jnp.dot(hid.astype(jnp.bfloat16), w2_ref[0],
                    preferred_element_type=jnp.float32)                         # f32 [tm, H]
        y = y + (fi == 0).astype(jnp.float32) * b2_ref[0]                       # add b2 once / expert
        # routing weight column k from the resident lane-dense [tm, Ep] block (XLU lane reduce)
        wall = wall_ref[...]
        lane = jax.lax.broadcasted_iota(jnp.int32, wall.shape, 1)
        wcol = jnp.sum(jnp.where(lane == k, wall, 0.0), axis=-1, keepdims=True)  # [tm, 1]
        out_ref[...] += wcol * y


def run_moe(x_bf, w_dense, prep, *, tm, top_k):
    n, h = x_bf.shape
    e, _, f = prep["w1"].shape
    t = n // tm
    ep = _round_up(e, 128)

    # per-(token-tile, expert) activity flags + DMA-eliding fetch indices, flattened to 1D so the
    # SMEM padding stays near-tight ([T, E] 2D would pad the trailing dim to 128).
    w_tiles = w_dense.reshape(t, tm, e)
    active = jnp.any(w_tiles != 0.0, axis=1)                                    # [T, E] bool
    flags = active.astype(jnp.int32)
    first = jnp.where(jnp.any(active, axis=1), jnp.argmax(active, axis=1), 0).astype(jnp.int32)
    prev, cols = first, []
    for ei in range(e):                                                         # E is small & static
        cur = jnp.where(active[:, ei], jnp.int32(ei), prev)
        cols.append(cur)
        prev = cur
    fetch = jnp.stack(cols, axis=1).astype(jnp.int32)                           # [T, E]
    flags1 = flags.reshape(-1)                                                  # [T*E] SMEM
    fetch1 = fetch.reshape(-1)                                                  # [T*E] SMEM

    # one lane-dense routing-weight block per token tile (resident across expert / ffn axes)
    w_pad = jnp.pad(w_dense, ((0, 0), (0, ep - e)))                             # [N, Ep] f32

    # generation-aware FFN tiling + VMEM budget computed from actual block sizes
    capacity = _vmem_capacity_bytes()
    budget = _vmem_budget_bytes()
    nbuf = 3 if capacity >= (96 << 20) else 2      # triple-buffer expert weights on v5e/v6e only

    def need(tf_, nb):
        return (2 * tm * h * 2 + 2 * tm * h * 4 + 2 * tm * ep * 4               # x / out / wall
                + nb * (h * tf_ + tf_ * h) * 2                                  # bf16 weight blocks
                + 2 * (tf_ + h) * 4)                                            # bias blocks

    def pick_tf(nb):
        cands = [f] + [c for c in (4096, 2048, 1024, 512, 256, 128) if c < f and f % c == 0]
        for tf_ in cands:
            if need(tf_, nb) <= budget:
                return tf_
        return cands[-1]

    tf = pick_tf(nbuf)
    if nbuf == 3 and need(tf, nbuf) > budget:
        nbuf = 2
        tf = pick_tf(nbuf)
    nf = f // tf
    vmem_limit = int(min(capacity - (4 << 20), max(32 << 20, need(tf, nbuf) + (16 << 20))))

    tok = lambda i, k, fi, *_: (i, 0)

    def _fi_eff(fi, act):
        # freeze the FFN-chunk index for inactive experts so their weight DMA is fully elided
        return fi * act + (nf - 1) * (1 - act)

    def w1_map(i, k, fi, flags_ref, fetch_ref):
        idx = i * e + k
        return (fetch_ref[idx], 0, _fi_eff(fi, flags_ref[idx]))

    def b1_map(i, k, fi, flags_ref, fetch_ref):
        idx = i * e + k
        return (fetch_ref[idx], 0, _fi_eff(fi, flags_ref[idx]))

    def w2_map(i, k, fi, flags_ref, fetch_ref):
        idx = i * e + k
        return (fetch_ref[idx], _fi_eff(fi, flags_ref[idx]), 0)

    def b2_map(i, k, fi, flags_ref, fetch_ref):
        return (fetch_ref[i * e + k], 0, 0)

    wkw = {"pipeline_mode": pl.Buffered(3)} if nbuf == 3 else {}

    grid_spec = pltpu.PrefetchScalarGridSpec(
        num_scalar_prefetch=2,
        grid=(t, e, nf),
        in_specs=[pl.BlockSpec((tm, h), tok),            # x (bf16), resident per tile
                  pl.BlockSpec((tm, ep), tok),           # routing weights (f32), resident per tile
                  pl.BlockSpec((1, h, tf), w1_map, **wkw),
                  pl.BlockSpec((1, 1, tf), b1_map),
                  pl.BlockSpec((1, tf, h), w2_map, **wkw),
                  pl.BlockSpec((1, 1, h), b2_map)],
        out_specs=pl.BlockSpec((tm, h), tok),
    )

    cost = pl.CostEstimate(
        flops=int(2 * n * top_k * (h * f + f * h)),
        transcendentals=int(n * top_k * f),
        bytes_accessed=int(t * e * (h * f + f * h) * 2 + n * h * (2 + 4) + n * ep * 4),
    )

    return pl.pallas_call(
        functools.partial(moe_expert_kernel, e=e),
        out_shape=jax.ShapeDtypeStruct((n, h), jnp.float32),
        grid_spec=grid_spec,
        cost_estimate=cost,
        compiler_params=pltpu.CompilerParams(
            dimension_semantics=("parallel", "arbitrary", "arbitrary"),
            vmem_limit_bytes=vmem_limit),
    )(flags1, fetch1, x_bf, w_pad, prep["w1_bf"], prep["b1"], prep["w2_bf"], prep["b2"])


# ----------------------------------------------------------------------------- routing glue (plain JAX)
def compute_routing_weights(conf, gprobs, eprobs, *, num_experts, num_groups, top_k):
    n = conf.shape[0]
    epg = num_experts // num_groups
    ep = eprobs.reshape(n, num_groups, epg)
    k_group = min(2, num_groups)
    top_gp, top_gi = jax.lax.top_k(gprobs, k_group)
    final = jnp.zeros((n, num_experts), jnp.float32)
    k_inner = min(top_k, epg)
    for slot in range(k_group):
        g = top_gi[:, slot]
        gp = top_gp[:, slot][:, None]
        idx = jnp.broadcast_to(g[:, None, None], (n, 1, epg))
        sel = jnp.take_along_axis(ep, idx, axis=1)[:, 0, :]                     # [N, epg]
        tvals, tids = jax.lax.top_k(sel, k_inner)
        weighted = tvals * conf * gp
        gids = tids + g[:, None] * epg
        final = final + jnp.einsum(
            "nk,nke->ne", weighted, jax.nn.one_hot(gids, num_experts, dtype=jnp.float32))
    final = final / (final.sum(axis=-1, keepdims=True) + 1e-9)
    top_p, top_i = jax.lax.top_k(final, top_k)
    top_p = top_p / top_p.sum(axis=-1, keepdims=True)
    return jnp.einsum("nk,nke->ne", top_p,
                      jax.nn.one_hot(top_i, num_experts, dtype=jnp.float32))


@functools.partial(jax.jit, static_argnames=("num_experts", "num_groups", "num_experts_per_tok"))
def enhanced_hierarchical_moe_forward(x, prep, *, num_experts, num_groups, num_experts_per_tok):
    b, s, h = x.shape
    x_bf = x.reshape(-1, h).astype(jnp.bfloat16)     # bf16 operands, f32 accumulation in-kernel
    n = x_bf.shape[0]
    tm = _pick_tm(n, h, _vmem_budget_bytes())
    assert n % tm == 0
    conf, gprobs, eprobs = run_router(x_bf, prep, tm=tm,
                                      num_groups=num_groups, num_experts=num_experts)
    w_dense = compute_routing_weights(conf, gprobs, eprobs, num_experts=num_experts,
                                      num_groups=num_groups, top_k=num_experts_per_tok)
    out = run_moe(x_bf, w_dense, prep, tm=tm, top_k=num_experts_per_tok)
    aux_loss = jnp.zeros((), jnp.float32)            # eval-mode aux loss
    return out.reshape(b, s, h), aux_loss


# ----------------------------------------------------------------------------- pure-JAX references
def reference_router(xf, p, *, num_experts, num_groups, dtype):
    gelu = functools.partial(jax.nn.gelu, approximate=False)
    if dtype == jnp.float32:
        mm = lambda a, b: jnp.dot(a, b, precision=jax.lax.Precision.HIGHEST)
    else:
        mm = lambda a, b: jnp.dot(a.astype(dtype), b.astype(dtype),
                                  preferred_element_type=jnp.float32)
    x = xf.astype(dtype) if dtype != jnp.float32 else xf
    h1 = gelu(mm(x, p["wc1"]) + p["bc1"])
    conf = jax.nn.sigmoid(jnp.dot(h1, p["wc2"], precision=jax.lax.Precision.HIGHEST) + p["bc2"])
    gprobs = jax.nn.softmax(mm(x, p["wg"]) + p["bg"], axis=-1)
    el = mm(x, p["we_cat"]) + p["be_cat"]
    n = xf.shape[0]
    epg = num_experts // num_groups
    eprobs = jax.nn.softmax(el.reshape(n, num_groups, epg), axis=-1).reshape(n, num_experts)
    return conf, gprobs, eprobs


def reference_expert_combine(xf, w, p, *, num_experts, dtype):
    gelu = functools.partial(jax.nn.gelu, approximate=False)
    if dtype == jnp.float32:
        dot = functools.partial(jnp.dot, precision=jax.lax.Precision.HIGHEST,
                                preferred_element_type=jnp.float32)
    else:
        dot = functools.partial(jnp.dot, preferred_element_type=jnp.float32)
    xe = xf.astype(dtype)
    out = jnp.zeros_like(xf)
    for e in range(num_experts):
        he = gelu(dot(xe, p["w1"][e].astype(dtype)) + p["b1"][e, 0])
        ye = dot(he.astype(dtype), p["w2"][e].astype(dtype)) + p["b2"][e, 0]
        out = out + w[:, e:e + 1] * ye
    return out


# ----------------------------------------------------------------------------- params
def init_params(key, *, hidden, ffn, num_experts, num_groups):
    h, f, e, g = hidden, ffn, num_experts, num_groups
    h2 = h // 2
    ks = jax.random.split(key, 12)

    def lin(k, fan_in, shape):
        bound = 1.0 / math.sqrt(fan_in)
        return jax.random.uniform(k, shape, jnp.float32, -bound, bound)

    return {
        "w1": lin(ks[0], h, (e, h, f)),  "b1": lin(ks[1], h, (e, 1, f)),
        "w2": lin(ks[2], f, (e, f, h)),  "b2": lin(ks[3], f, (e, 1, h)),
        "wg": lin(ks[4], h, (h, g)),     "bg": lin(ks[5], h, (1, g)),
        # per-group expert routers, concatenated along their output dim -> [H, E]
        "we_cat": lin(ks[6], h, (h, e)), "be_cat": lin(ks[7], h, (1, e)),
        "wc1": lin(ks[8], h, (h, h2)),   "bc1": lin(ks[9], h, (1, h2)),
        "wc2": lin(ks[10], h2, (h2, 1)), "bc2": lin(ks[11], h2, (1, 1)),
    }


if __name__ == "__main__":
    B, S, H, FFN = 2, 8, 32, 64
    E, K, G = 16, 4, 4            # num_experts, experts_per_tok, expert_groups (module defaults)
    key = jax.random.PRNGKey(0)
    kp, kx = jax.random.split(key)
    params = init_params(kp, hidden=H, ffn=FFN, num_experts=E, num_groups=G)
    prep = prepare_params(params, num_groups=G, num_experts=E)     # one-time slab / bf16 prep
    x = jax.random.normal(kx, (B, S, H), jnp.float32)

    out, aux = enhanced_hierarchical_moe_forward(
        x, prep, num_experts=E, num_groups=G, num_experts_per_tok=K)
    out = jax.block_until_ready(out)
    assert out.shape == (B, S, H)
    assert float(aux) == 0.0

    # --- per-component check 1: fused Pallas router ---
    xf = x.reshape(-1, H).astype(jnp.float32)
    x_bf = xf.astype(jnp.bfloat16)
    tm = _pick_tm(xf.shape[0], H, _vmem_budget_bytes())
    conf_k, gp_k, ep_k = run_router(x_bf, prep, tm=tm, num_groups=G, num_experts=E)
    # tight vs a bf16-operand / f32-accumulation reference (same arithmetic as the kernel)
    conf_r, gp_r, ep_r = reference_router(xf, params, num_experts=E, num_groups=G,
                                          dtype=jnp.bfloat16)
    for got, ref, name in ((conf_k, conf_r, "conf"), (gp_k, gp_r, "gprobs"), (ep_k, ep_r, "eprobs")):
        err = float(jnp.max(jnp.abs(got - ref)))
        assert err < 2e-3, f"router {name} (bf16-matched) max abs err {err}"
    # loose (bf16-quantization bound) vs the full-f32 reference
    conf_r, gp_r, ep_r = reference_router(xf, params, num_experts=E, num_groups=G,
                                          dtype=jnp.float32)
    for got, ref, name in ((conf_k, conf_r, "conf"), (gp_k, gp_r, "gprobs"), (ep_k, ep_r, "eprobs")):
        err = float(jnp.max(jnp.abs(got - ref)))
        assert err < 3e-2, f"router {name} (f32) max abs err {err}"

    # --- per-component check 2: sparse expert-combine kernel on identical routing weights ---
    w_k = compute_routing_weights(conf_k, gp_k, ep_k, num_experts=E, num_groups=G, top_k=K)
    out_flat = out.reshape(-1, H)
    ref_bf = reference_expert_combine(xf, w_k, params, num_experts=E, dtype=jnp.bfloat16)
    err_bf = float(jnp.max(jnp.abs(out_flat - ref_bf)))
    assert err_bf < 2e-3, f"bf16-matched max abs err {err_bf}"
    ref_f32 = reference_expert_combine(xf, w_k, params, num_experts=E, dtype=jnp.float32)
    err_f32 = float(jnp.max(jnp.abs(out_flat - ref_f32)))
    assert err_f32 < 2.5e-2, f"f32 max abs err {err_f32}"

    print("KERNEL_OK")
</pallas_src>

<mosaic_0001>
module attributes {stable_mosaic.version = 11 : i64} {
  func.func @router_kernel(%arg0: i32, %arg1: memref<16x32xbf16, #tpu.memory_space<vmem>>, %arg2: memref<32x256xbf16, #tpu.memory_space<vmem>>, %arg3: memref<1x256xf32, #tpu.memory_space<vmem>>, %arg4: memref<1x128xf32, #tpu.memory_space<vmem>>, %arg5: memref<1x1xf32, #tpu.memory_space<vmem>>, %arg6: memref<16x128xf32, #tpu.memory_space<vmem>>) attributes {dimension_semantics = [#tpu.dimension_semantics<parallel>], iteration_bounds = array<i64: 1>, scalar_prefetch = 0 : i64, scratch_operands = 0 : i64, tpu.core_type = #tpu.core_type<tc>, window_params = [{transform_indices = @transform_0, window_bounds = array<i64: 16, 32>}, {pipeline_mode = #tpu.pipeline_mode<synchronous>, transform_indices = @transform_1, window_bounds = array<i64: 32, 256>}, {pipeline_mode = #tpu.pipeline_mode<synchronous>, transform_indices = @transform_2, window_bounds = array<i64: 1, 256>}, {pipeline_mode = #tpu.pipeline_mode<synchronous>, transform_indices = @transform_3, window_bounds = array<i64: 1, 128>}, {pipeline_mode = #tpu.pipeline_mode<synchronous>, transform_indices = @transform_4, window_bounds = array<i64: 1, 1>}, {transform_indices = @transform_5, window_bounds = array<i64: 16, 128>}]} {
    %c0 = arith.constant 0 : index
    %c0_0 = arith.constant 0 : index
    %0 = vector.load %arg1[%c0, %c0_0] : memref<16x32xbf16, #tpu.memory_space<vmem>>, vector<16x32xbf16>
    %c0_1 = arith.constant 0 : index
    %c0_2 = arith.constant 0 : index
    %1 = vector.load %arg2[%c0_1, %c0_2] : memref<32x256xbf16, #tpu.memory_space<vmem>>, vector<32x256xbf16>
    %cst = arith.constant dense<0.000000e+00> : vector<16x256xf32>
    %2 = tpu.matmul %0, %1, %cst {dimension_numbers = #tpu.dot_dimension_numbers<[1], [0], [0], [1], [0, 0, 1, 1], [], []>} : vector<16x32xbf16>, vector<32x256xbf16>, vector<16x256xf32> -> vector<16x256xf32>
    %c0_3 = arith.constant 0 : index
    %c0_4 = arith.constant 0 : index
    %3 = vector.load %arg3[%c0_3, %c0_4] : memref<1x256xf32, #tpu.memory_space<vmem>>, vector<1x256xf32>
    %4 = vector.broadcast %3 : vector<1x256xf32> to vector<16x256xf32>
    %5 = arith.addf %2, %4 : vector<16x256xf32>
    %6 = vector.extract_strided_slice %5 {offsets = [0, 0], sizes = [16, 128], strides = [1, 1]} : vector<16x256xf32> to vector<16x128xf32>
    %7 = vector.extract_strided_slice %5 {offsets = [0, 128], sizes = [16, 128], strides = [1, 1]} : vector<16x256xf32> to vector<16x128xf32>
    %cst_5 = arith.constant 5.000000e-01 : f32
    %8 = vector.broadcast %cst_5 : f32 to vector<16x128xf32>
    %9 = arith.mulf %8, %6 : vector<16x128xf32>
    %cst_6 = arith.constant 0.707106769 : f32
    %10 = vector.broadcast %cst_6 : f32 to vector<16x128xf32>
    %11 = arith.mulf %6, %10 : vector<16x128xf32>
    %cst_7 = arith.constant 0.000000e+00 : f32
    %12 = vector.broadcast %cst_7 : f32 to vector<16x128xf32>
    %13 = arith.cmpf oge, %11, %12 : vector<16x128xf32>
    %cst_8 = arith.constant 1.000000e+00 : f32
    %cst_9 = arith.constant -1.000000e+00 : f32
    %14 = vector.broadcast %cst_8 : f32 to vector<16x128xf32>
    %15 = vector.broadcast %cst_9 : f32 to vector<16x128xf32>
    %16 = arith.select %13, %14, %15 : vector<16x128xi1>, vector<16x128xf32>
    %17 = math.absf %11 : vector<16x128xf32>
    %cst_10 = arith.constant 0.327591091 : f32
    %18 = vector.broadcast %cst_10 : f32 to vector<16x128xf32>
    %19 = arith.mulf %18, %17 : vector<16x128xf32>
    %cst_11 = arith.constant 1.000000e+00 : f32
    %20 = vector.broadcast %cst_11 : f32 to vector<16x128xf32>
    %21 = arith.addf %20, %19 : vector<16x128xf32>
    %cst_12 = arith.constant 1.000000e+00 : f32
    %22 = vector.broadcast %cst_12 : f32 to vector<16x128xf32>
    %23 = arith.divf %22, %21 : vector<16x128xf32>
    %cst_13 = arith.constant 1.06140542 : f32
    %24 = vector.broadcast %cst_13 : f32 to vector<16x128xf32>
    %25 = arith.mulf %24, %23 : vector<16x128xf32>
    %cst_14 = arith.constant -1.45315206 : f32
    %26 = vector.broadcast %cst_14 : f32 to vector<16x128xf32>
    %27 = arith.addf %25, %26 : vector<16x128xf32>
    %28 = arith.mulf %27, %23 : vector<16x128xf32>
    %cst_15 = arith.constant 1.42141378 : f32
    %29 = vector.broadcast %cst_15 : f32 to vector<16x128xf32>
    %30 = arith.addf %28, %29 : vector<16x128xf32>
    %31 = arith.mulf %30, %23 : vector<16x128xf32>
    %cst_16 = arith.constant -0.284496725 : f32
    %32 = vector.broadcast %cst_16 : f32 to vector<16x128xf32>
    %33 = arith.addf %31, %32 : vector<16x128xf32>
    %34 = arith.mulf %33, %23 : vector<16x128xf32>
    %cst_17 = arith.constant 0.254829586 : f32
    %35 = vector.broadcast %cst_17 : f32 to vector<16x128xf32>
    %36 = arith.addf %34, %35 : vector<16x128xf32>
    %37 = arith.mulf %36, %23 : vector<16x128xf32>
    %cst_18 = arith.constant 0.000000e+00 : f32
    %38 = vector.broadcast %cst_18 : f32 to vector<16x128xf32>
    %39 = arith.subf %38, %17 : vector<16x128xf32>
    %40 = arith.mulf %39, %17 : vector<16x128xf32>
    %41 = math.exp %40 : vector<16x128xf32>
    %42 = arith.mulf %37, %41 : vector<16x128xf32>
    %cst_19 = arith.constant 1.000000e+00 : f32
    %43 = vector.broadcast %cst_19 : f32 to vector<16x128xf32>
    %44 = arith.subf %43, %42 : vector<16x128xf32>
    %45 = arith.mulf %16, %44 : vector<16x128xf32>
    %cst_20 = arith.constant 1.000000e+00 : f32
    %46 = vector.broadcast %cst_20 : f32 to vector<16x128xf32>
    %47 = arith.addf %46, %45 : vector<16x128xf32>
    %48 = arith.mulf %9, %47 : vector<16x128xf32>
    %c0_21 = arith.constant 0 : index
    %c0_22 = arith.constant 0 : index
    %49 = vector.load %arg4[%c0_21, %c0_22] : memref<1x128xf32, #tpu.memory_space<vmem>>, vector<1x128xf32>
    %50 = vector.broadcast %49 : vector<1x128xf32> to vector<16x128xf32>
    %51 = arith.mulf %48, %50 : vector<16x128xf32>
    %cst_23 = arith.constant dense<0.000000e+00> : vector<16xf32>
    %52 = vector.multi_reduction <add>, %51, %cst_23 [1] : vector<16x128xf32> to vector<16xf32>
    %53 = vector.shape_cast %52 : vector<16xf32> to vector<16x1xf32>
    %c0_24 = arith.constant 0 : index
    %c0_25 = arith.constant 0 : index
    %54 = vector.load %arg5[%c0_24, %c0_25] : memref<1x1xf32, #tpu.memory_space<vmem>>, vector<1x1xf32>
    %55 = vector.broadcast %54 : vector<1x1xf32> to vector<16x1xf32>
    %56 = arith.addf %53, %55 : vector<16x1xf32>
    %57 = arith.negf %56 : vector<16x1xf32>
    %58 = math.exp %57 : vector<16x1xf32>
    %cst_26 = arith.constant 1.000000e+00 : f32
    %59 = vector.broadcast %cst_26 : f32 to vector<16x1xf32>
    %60 = arith.addf %59, %58 : vector<16x1xf32>
    %61 = arith.divf %59, %60 : vector<16x1xf32>
    %62 = tpu.iota {dimensions = array<i32: 1>} : vector<16x128xi32>
    %c4_i32 = arith.constant 4 : i32
    %63 = vector.broadcast %c4_i32 : i32 to vector<16x128xi32>
    %64 = arith.cmpi slt, %62, %63 : vector<16x128xi32>
    %cst_27 = arith.constant 0xFF800000 : f32
    %65 = vector.broadcast %cst_27 : f32 to vector<16x128xf32>
    %66 = arith.select %64, %7, %65 : vector<16x128xi1>, vector<16x128xf32>
    %cst_28 = arith.constant dense<0xFF800000> : vector<16xf32>
    %67 = vector.multi_reduction <maximumf>, %66, %cst_28 [1] : vector<16x128xf32> to vector<16xf32>
    %68 = vector.shape_cast %67 : vector<16xf32> to vector<16x1xf32>
    %69 = vector.broadcast %68 : vector<16x1xf32> to vector<16x128xf32>
    %70 = arith.subf %66, %69 : vector<16x128xf32>
    %71 = math.exp %70 : vector<16x128xf32>
    %cst_29 = arith.constant dense<0.000000e+00> : vector<16xf32>
    %72 = vector.multi_reduction <add>, %71, %cst_29 [1] : vector<16x128xf32> to vector<16xf32>
    %73 = vector.shape_cast %72 : vector<16xf32> to vector<16x1xf32>
    %74 = vector.broadcast %73 : vector<16x1xf32> to vector<16x128xf32>
    %75 = arith.divf %71, %74 : vector<16x128xf32>
    %cst_30 = arith.constant 0.000000e+00 : f32
    %76 = vector.broadcast %cst_30 : f32 to vector<16x128xf32>
    %c4_i32_31 = arith.constant 4 : i32
    %77 = vector.broadcast %c4_i32_31 : i32 to vector<16x128xi32>
    %78 = arith.cmpi sge, %62, %77 : vector<16x128xi32>
    %c8_i32 = arith.constant 8 : i32
    %79 = vector.broadcast %c8_i32 : i32 to vector<16x128xi32>
    %80 = arith.cmpi slt, %62, %79 : vector<16x128xi32>
    %81 = arith.andi %78, %80 : vector<16x128xi1>
    %cst_32 = arith.constant 0xFF800000 : f32
    %82 = vector.broadcast %cst_32 : f32 to vector<16x128xf32>
    %83 = arith.select %81, %7, %82 : vector<16x128xi1>, vector<16x128xf32>
    %cst_33 = arith.constant dense<0xFF800000> : vector<16xf32>
    %84 = vector.multi_reduction <maximumf>, %83, %cst_33 [1] : vector<16x128xf32> to vector<16xf32>
    %85 = vector.shape_cast %84 : vector<16xf32> to vector<16x1xf32>
    %86 = vector.broadcast %85 : vector<16x1xf32> to vector<16x128xf32>
    %87 = arith.subf %83, %86 : vector<16x128xf32>
    %88 = math.exp %87 : vector<16x128xf32>
    %cst_34 = arith.constant dense<0.000000e+00> : vector<16xf32>
    %89 = vector.multi_reduction <add>, %88, %cst_34 [1] : vector<16x128xf32> to vector<16xf32>
    %90 = vector.shape_cast %89 : vector<16xf32> to vector<16x1xf32>
    %91 = vector.broadcast %90 : vector<16x1xf32> to vector<16x128xf32>
    %92 = arith.divf %88, %91 : vector<16x128xf32>
    %93 = arith.addf %76, %92 : vector<16x128xf32>
    %c8_i32_35 = arith.constant 8 : i32
    %94 = vector.broadcast %c8_i32_35 : i32 to vector<16x128xi32>
    %95 = arith.cmpi sge, %62, %94 : vector<16x128xi32>
    %c12_i32 = arith.constant 12 : i32
    %96 = vector.broadcast %c12_i32 : i32 to vector<16x128xi32>
    %97 = arith.cmpi slt, %62, %96 : vector<16x128xi32>
    %98 = arith.andi %95, %97 : vector<16x128xi1>
    %cst_36 = arith.constant 0xFF800000 : f32
    %99 = vector.broadcast %cst_36 : f32 to vector<16x128xf32>
    %100 = arith.select %98, %7, %99 : vector<16x128xi1>, vector<16x128xf32>
    %cst_37 = arith.constant dense<0xFF800000> : vector<16xf32>
    %101 = vector.multi_reduction <maximumf>, %100, %cst_37 [1] : vector<16x128xf32> to vector<16xf32>
    %102 = vector.shape_cast %101 : vector<16xf32> to vector<16x1xf32>
    %103 = vector.broadcast %102 : vector<16x1xf32> to vector<16x128xf32>
    %104 = arith.subf %100, %103 : vector<16x128xf32>
    %105 = math.exp %104 : vector<16x128xf32>
    %cst_38 = arith.constant dense<0.000000e+00> : vector<16xf32>
    %106 = vector.multi_reduction <add>, %105, %cst_38 [1] : vector<16x128xf32> to vector<16xf32>
    %107 = vector.shape_cast %106 : vector<16xf32> to vector<16x1xf32>
    %108 = vector.broadcast %107 : vector<16x1xf32> to vector<16x128xf32>
    %109 = arith.divf %105, %108 : vector<16x128xf32>
    %110 = arith.addf %93, %109 : vector<16x128xf32>
    %c12_i32_39 = arith.constant 12 : i32
    %111 = vector.broadcast %c12_i32_39 : i32 to vector<16x128xi32>
    %112 = arith.cmpi sge, %62, %111 : vector<16x128xi32>
    %c16_i32 = arith.constant 16 : i32
    %113 = vector.broadcast %c16_i32 : i32 to vector<16x128xi32>
    %114 = arith.cmpi slt, %62, %113 : vector<16x128xi32>
    %115 = arith.andi %112, %114 : vector<16x128xi1>
    %cst_40 = arith.constant 0xFF800000 : f32
    %116 = vector.broadcast %cst_40 : f32 to vector<16x128xf32>
    %117 = arith.select %115, %7, %116 : vector<16x128xi1>, vector<16x128xf32>
    %cst_41 = arith.constant dense<0xFF800000> : vector<16xf32>
    %118 = vector.multi_reduction <maximumf>, %117, %cst_41 [1] : vector<16x128xf32> to vector<16xf32>
    %119 = vector.shape_cast %118 : vector<16xf32> to vector<16x1xf32>
    %120 = vector.broadcast %119 : vector<16x1xf32> to vector<16x128xf32>
    %121 = arith.subf %117, %120 : vector<16x128xf32>
    %122 = math.exp %121 : vector<16x128xf32>
    %cst_42 = arith.constant dense<0.000000e+00> : vector<16xf32>
    %123 = vector.multi_reduction <add>, %122, %cst_42 [1] : vector<16x128xf32> to vector<16xf32>
    %124 = vector.shape_cast %123 : vector<16xf32> to vector<16x1xf32>
    %125 = vector.broadcast %124 : vector<16x1xf32> to vector<16x128xf32>
    %126 = arith.divf %122, %125 : vector<16x128xf32>
    %127 = arith.addf %110, %126 : vector<16x128xf32>
    %c16_i32_43 = arith.constant 16 : i32
    %128 = vector.broadcast %c16_i32_43 : i32 to vector<16x128xi32>
    %129 = arith.cmpi sge, %62, %128 : vector<16x128xi32>
    %c20_i32 = arith.constant 20 : i32
    %130 = vector.broadcast %c20_i32 : i32 to vector<16x128xi32>
    %131 = arith.cmpi slt, %62, %130 : vector<16x128xi32>
    %132 = arith.andi %129, %131 : vector<16x128xi1>
    %cst_44 = arith.constant 0xFF800000 : f32
    %133 = vector.broadcast %cst_44 : f32 to vector<16x128xf32>
    %134 = arith.select %132, %7, %133 : vector<16x128xi1>, vector<16x128xf32>
    %cst_45 = arith.constant dense<0xFF800000> : vector<16xf32>
    %135 = vector.multi_reduction <maximumf>, %134, %cst_45 [1] : vector<16x128xf32> to vector<16xf32>
    %136 = vector.shape_cast %135 : vector<16xf32> to vector<16x1xf32>
    %137 = vector.broadcast %136 : vector<16x1xf32> to vector<16x128xf32>
    %138 = arith.subf %134, %137 : vector<16x128xf32>
    %139 = math.exp %138 : vector<16x128xf32>
    %cst_46 = arith.constant dense<0.000000e+00> : vector<16xf32>
    %140 = vector.multi_reduction <add>, %139, %cst_46 [1] : vector<16x128xf32> to vector<16xf32>
    %141 = vector.shape_cast %140 : vector<16xf32> to vector<16x1xf32>
    %142 = vector.broadcast %141 : vector<16x1xf32> to vector<16x128xf32>
    %143 = arith.divf %139, %142 : vector<16x128xf32>
    %144 = arith.addf %127, %143 : vector<16x128xf32>
    %145 = arith.addf %75, %144 : vector<16x128xf32>
    %c20_i32_47 = arith.constant 20 : i32
    %146 = vector.broadcast %c20_i32_47 : i32 to vector<16x128xi32>
    %147 = arith.cmpi eq, %62, %146 : vector<16x128xi32>
    %cst_48 = arith.constant 0.000000e+00 : f32
    %148 = vector.shape_cast %61 : vector<16x1xf32> to vector<16x1xf32>
    %149 = vector.broadcast %148 : vector<16x1xf32> to vector<16x128xf32>
    %150 = vector.broadcast %cst_48 : f32 to vector<16x128xf32>
    %151 = arith.select %147, %149, %150 : vector<16x128xi1>, vector<16x128xf32>
    %152 = arith.addf %145, %151 : vector<16x128xf32>
    %c0_49 = arith.constant 0 : index
    %c0_50 = arith.constant 0 : index
    %153 = vector.load %arg6[%c0_49, %c0_50] : memref<16x128xf32, #tpu.memory_space<vmem>>, vector<16x128xf32>
    tpu.vector_store %arg6[%c0_49, %c0_50], %152 {strides = array<i32>} : memref<16x128xf32, #tpu.memory_space<vmem>>, vector<16x128xf32>,
    return
  }
  func.func @transform_0(%arg0: i32) -> (i32, i32) {
    %c0_i32 = arith.constant 0 : i32
    %c0_i32_0 = arith.constant 0 : i32
    return %arg0, %c0_i32 : i32, i32
  }
  func.func @transform_1(%arg0: i32) -> (i32, i32) {
    %c0_i32 = arith.constant 0 : i32
    %c0_i32_0 = arith.constant 0 : i32
    %c0_i32_1 = arith.constant 0 : i32
    return %c0_i32, %c0_i32_0 : i32, i32
  }
  func.func @transform_2(%arg0: i32) -> (i32, i32) {
    %c0_i32 = arith.constant 0 : i32
    %c0_i32_0 = arith.constant 0 : i32
    %c0_i32_1 = arith.constant 0 : i32
    return %c0_i32, %c0_i32_0 : i32, i32
  }
  func.func @transform_3(%arg0: i32) -> (i32, i32) {
    %c0_i32 = arith.constant 0 : i32
    %c0_i32_0 = arith.constant 0 : i32
    %c0_i32_1 = arith.constant 0 : i32
    return %c0_i32, %c0_i32_0 : i32, i32
  }
  func.func @transform_4(%arg0: i32) -> (i32, i32) {
    %c0_i32 = arith.constant 0 : i32
    %c0_i32_0 = arith.constant 0 : i32
    %c0_i32_1 = arith.constant 0 : i32
    return %c0_i32, %c0_i32_0 : i32, i32
  }
  func.func @transform_5(%arg0: i32) -> (i32, i32) {
    %c0_i32 = arith.constant 0 : i32
    %c0_i32_0 = arith.constant 0 : i32
    return %arg0, %c0_i32 : i32, i32
  }
}

module attributes {stable_mosaic.version = 11 : i64} {
  func.func @moe_expert_kernel(%arg0: i32, %arg1: i32, %arg2: i32, %arg3: memref<16xi32, #tpu.memory_space<smem>>, %arg4: memref<16xi32, #tpu.memory_space<smem>>, %arg5: memref<16x32xbf16, #tpu.memory_space<vmem>>, %arg6: memref<16x128xf32, #tpu.memory_space<vmem>>, %arg7: memref<1x32x64xbf16, #tpu.memory_space<vmem>>, %arg8: memref<1x1x64xf32, #tpu.memory_space<vmem>>, %arg9: memref<1x64x32xbf16, #tpu.memory_space<vmem>>, %arg10: memref<1x1x32xf32, #tpu.memory_space<vmem>>, %arg11: memref<16x32xf32, #tpu.memory_space<vmem>>) attributes {dimension_semantics = [#tpu.dimension_semantics<parallel>, #tpu.dimension_semantics<arbitrary>, #tpu.dimension_semantics<arbitrary>], iteration_bounds = array<i64: 1, 16, 1>, scalar_prefetch = 2 : i64, scratch_operands = 0 : i64, tpu.core_type = #tpu.core_type<tc>, window_params = [{transform_indices = @transform_0, window_bounds = array<i64: 16, 32>}, {transform_indices = @transform_1, window_bounds = array<i64: 16, 128>}, {transform_indices = @transform_2, window_bounds = array<i64: 1, 32, 64>}, {transform_indices = @transform_3, window_bounds = array<i64: 1, 1, 64>}, {transform_indices = @transform_4, window_bounds = array<i64: 1, 64, 32>}, {transform_indices = @transform_5, window_bounds = array<i64: 1, 1, 32>}, {transform_indices = @transform_6, window_bounds = array<i64: 16, 32>}]} {
    %c0_i32 = arith.constant 0 : i32
    %0 = arith.cmpi eq, %arg1, %c0_i32 : i32
    %c0_i32_0 = arith.constant 0 : i32
    %1 = arith.cmpi eq, %arg2, %c0_i32_0 : i32
    %2 = arith.andi %0, %1 : i1
    %3 = arith.extui %2 : i1 to i32
    %c0_i32_1 = arith.constant 0 : i32
    %4 = arith.cmpi ne, %3, %c0_i32_1 : i32
    scf.if %4 {
      %cst = arith.constant 0.000000e+00 : f32
      %12 = vector.broadcast %cst : f32 to vector<16x32xf32>
      %c0 = arith.constant 0 : index
      %c0_4 = arith.constant 0 : index
      %13 = vector.load %arg11[%c0, %c0_4] : memref<16x32xf32, #tpu.memory_space<vmem>>, vector<16x32xf32>
      tpu.vector_store %arg11[%c0, %c0_4], %12 {strides = array<i32>} : memref<16x32xf32, #tpu.memory_space<vmem>>, vector<16x32xf32>,
    } else {
    }
    %c16_i32 = arith.constant 16 : i32
    %5 = arith.muli %arg0, %c16_i32 : i32
    %6 = arith.addi %5, %arg1 : i32
    %7 = arith.index_cast %6 : i32 to index
    %8 = memref.load %arg3[%7] : memref<16xi32, #tpu.memory_space<smem>>
    %c0_i32_2 = arith.constant 0 : i32
    %9 = arith.cmpi ne, %8, %c0_i32_2 : i32
    %10 = arith.extui %9 : i1 to i32
    %c0_i32_3 = arith.constant 0 : i32
    %11 = arith.cmpi ne, %10, %c0_i32_3 : i32
    scf.if %11 {
      %c0 = arith.constant 0 : index
      %c0_4 = arith.constant 0 : index
      %12 = vector.load %arg5[%c0, %c0_4] : memref<16x32xbf16, #tpu.memory_space<vmem>>, vector<16x32xbf16>
      %c0_5 = arith.constant 0 : index
      %c0_6 = arith.constant 0 : index
      %c0_7 = arith.constant 0 : index
      %13 = vector.load %arg7[%c0_5, %c0_6, %c0_7] : memref<1x32x64xbf16, #tpu.memory_space<vmem>>, vector<1x32x64xbf16>
      %14 = vector.shape_cast %13 : vector<1x32x64xbf16> to vector<32x64xbf16>
      %cst = arith.constant dense<0.000000e+00> : vector<16x64xf32>
      %15 = tpu.matmul %12, %14, %cst {dimension_numbers = #tpu.dot_dimension_numbers<[1], [0], [0], [1], [0, 0, 1, 1], [], []>} : vector<16x32xbf16>, vector<32x64xbf16>, vector<16x64xf32> -> vector<16x64xf32>
      %c0_8 = arith.constant 0 : index
      %c0_9 = arith.constant 0 : index
      %c0_10 = arith.constant 0 : index
      %16 = vector.load %arg8[%c0_8, %c0_9, %c0_10] : memref<1x1x64xf32, #tpu.memory_space<vmem>>, vector<1x1x64xf32>
      %17 = vector.shape_cast %16 : vector<1x1x64xf32> to vector<1x64xf32>
      %18 = vector.broadcast %17 : vector<1x64xf32> to vector<16x64xf32>
      %19 = arith.addf %15, %18 : vector<16x64xf32>
      %cst_11 = arith.constant 5.000000e-01 : f32
      %20 = vector.broadcast %cst_11 : f32 to vector<16x64xf32>
      %21 = arith.mulf %20, %19 : vector<16x64xf32>
      %cst_12 = arith.constant 0.707106769 : f32
      %22 = vector.broadcast %cst_12 : f32 to vector<16x64xf32>
      %23 = arith.mulf %19, %22 : vector<16x64xf32>
      %cst_13 = arith.constant 0.000000e+00 : f32
      %24 = vector.broadcast %cst_13 : f32 to vector<16x64xf32>
      %25 = arith.cmpf oge, %23, %24 : vector<16x64xf32>
      %cst_14 = arith.constant 1.000000e+00 : f32
      %cst_15 = arith.constant -1.000000e+00 : f32
      %26 = vector.broadcast %cst_14 : f32 to vector<16x64xf32>
      %27 = vector.broadcast %cst_15 : f32 to vector<16x64xf32>
      %28 = arith.select %25, %26, %27 : vector<16x64xi1>, vector<16x64xf32>
      %29 = math.absf %23 : vector<16x64xf32>
      %cst_16 = arith.constant 0.327591091 : f32
      %30 = vector.broadcast %cst_16 : f32 to vector<16x64xf32>
      %31 = arith.mulf %30, %29 : vector<16x64xf32>
      %cst_17 = arith.constant 1.000000e+00 : f32
      %32 = vector.broadcast %cst_17 : f32 to vector<16x64xf32>
      %33 = arith.addf %32, %31 : vector<16x64xf32>
      %cst_18 = arith.constant 1.000000e+00 : f32
      %34 = vector.broadcast %cst_18 : f32 to vector<16x64xf32>
      %35 = arith.divf %34, %33 : vector<16x64xf32>
      %cst_19 = arith.constant 1.06140542 : f32
      %36 = vector.broadcast %cst_19 : f32 to vector<16x64xf32>
      %37 = arith.mulf %36, %35 : vector<16x64xf32>
      %cst_20 = arith.constant -1.45315206 : f32
      %38 = vector.broadcast %cst_20 : f32 to vector<16x64xf32>
      %39 = arith.addf %37, %38 : vector<16x64xf32>
      %40 = arith.mulf %39, %35 : vector<16x64xf32>
      %cst_21 = arith.constant 1.42141378 : f32
      %41 = vector.broadcast %cst_21 : f32 to vector<16x64xf32>
      %42 = arith.addf %40, %41 : vector<16x64xf32>
      %43 = arith.mulf %42, %35 : vector<16x64xf32>
      %cst_22 = arith.constant -0.284496725 : f32
      %44 = vector.broadcast %cst_22 : f32 to vector<16x64xf32>
      %45 = arith.addf %43, %44 : vector<16x64xf32>
      %46 = arith.mulf %45, %35 : vector<16x64xf32>
      %cst_23 = arith.constant 0.254829586 : f32
      %47 = vector.broadcast %cst_23 : f32 to vector<16x64xf32>
      %48 = arith.addf %46, %47 : vector<16x64xf32>
      %49 = arith.mulf %48, %35 : vector<16x64xf32>
      %cst_24 = arith.constant 0.000000e+00 : f32
      %50 = vector.broadcast %cst_24 : f32 to vector<16x64xf32>
      %51 = arith.subf %50, %29 : vector<16x64xf32>
      %52 = arith.mulf %51, %29 : vector<16x64xf32>
      %53 = math.exp %52 : vector<16x64xf32>
      %54 = arith.mulf %49, %53 : vector<16x64xf32>
      %cst_25 = arith.constant 1.000000e+00 : f32
      %55 = vector.broadcast %cst_25 : f32 to vector<16x64xf32>
      %56 = arith.subf %55, %54 : vector<16x64xf32>
      %57 = arith.mulf %28, %56 : vector<16x64xf32>
      %cst_26 = arith.constant 1.000000e+00 : f32
      %58 = vector.broadcast %cst_26 : f32 to vector<16x64xf32>
      %59 = arith.addf %58, %57 : vector<16x64xf32>
      %60 = arith.mulf %21, %59 : vector<16x64xf32>
      %61 = arith.truncf %60 : vector<16x64xf32> to vector<16x64xbf16>
      %c0_27 = arith.constant 0 : index
      %c0_28 = arith.constant 0 : index
      %c0_29 = arith.constant 0 : index
      %62 = vector.load %arg9[%c0_27, %c0_28, %c0_29] : memref<1x64x32xbf16, #tpu.memory_space<vmem>>, vector<1x64x32xbf16>
      %63 = vector.shape_cast %62 : vector<1x64x32xbf16> to vector<64x32xbf16>
      %cst_30 = arith.constant dense<0.000000e+00> : vector<16x32xf32>
      %64 = tpu.matmul %61, %63, %cst_30 {dimension_numbers = #tpu.dot_dimension_numbers<[1], [0], [0], [1], [0, 0, 1, 1], [], []>} : vector<16x64xbf16>, vector<64x32xbf16>, vector<16x32xf32> -> vector<16x32xf32>
      %c0_i32_31 = arith.constant 0 : i32
      %65 = arith.cmpi eq, %arg2, %c0_i32_31 : i32
      %66 = arith.extui %65 : i1 to i32
      %67 = arith.sitofp %66 : i32 to f32
      %c0_32 = arith.constant 0 : index
      %c0_33 = arith.constant 0 : index
      %c0_34 = arith.constant 0 : index
      %68 = vector.load %arg10[%c0_32, %c0_33, %c0_34] : memref<1x1x32xf32, #tpu.memory_space<vmem>>, vector<1x1x32xf32>
      %69 = vector.shape_cast %68 : vector<1x1x32xf32> to vector<1x32xf32>
      %70 = vector.broadcast %67 : f32 to vector<1x32xf32>
      %71 = arith.mulf %70, %69 : vector<1x32xf32>
      %72 = vector.broadcast %71 : vector<1x32xf32> to vector<16x32xf32>
      %73 = arith.addf %64, %72 : vector<16x32xf32>
      %c0_35 = arith.constant 0 : index
      %c0_36 = arith.constant 0 : index
      %74 = vector.load %arg6[%c0_35, %c0_36] : memref<16x128xf32, #tpu.memory_space<vmem>>, vector<16x128xf32>
      %75 = tpu.iota {dimensions = array<i32: 1>} : vector<16x128xi32>
      %76 = vector.broadcast %arg1 : i32 to vector<16x128xi32>
      %77 = arith.cmpi eq, %75, %76 : vector<16x128xi32>
      %cst_37 = arith.constant 0.000000e+00 : f32
      %78 = vector.broadcast %cst_37 : f32 to vector<16x128xf32>
      %79 = arith.select %77, %74, %78 : vector<16x128xi1>, vector<16x128xf32>
      %cst_38 = arith.constant dense<0.000000e+00> : vector<16xf32>
      %80 = vector.multi_reduction <add>, %79, %cst_38 [1] : vector<16x128xf32> to vector<16xf32>
      %81 = vector.shape_cast %80 : vector<16xf32> to vector<16x1xf32>
      %c0_39 = arith.constant 0 : index
      %c0_40 = arith.constant 0 : index
      %82 = vector.load %arg11[%c0_39, %c0_40] : memref<16x32xf32, #tpu.memory_space<vmem>>, vector<16x32xf32>
      %83 = vector.broadcast %81 : vector<16x1xf32> to vector<16x32xf32>
      %84 = arith.mulf %83, %73 : vector<16x32xf32>
      %85 = arith.addf %82, %84 : vector<16x32xf32>
      %c0_41 = arith.constant 0 : index
      %c0_42 = arith.constant 0 : index
      %86 = vector.load %arg11[%c0_41, %c0_42] : memref<16x32xf32, #tpu.memory_space<vmem>>, vector<16x32xf32>
      tpu.vector_store %arg11[%c0_41, %c0_42], %85 {strides = array<i32>} : memref<16x32xf32, #tpu.memory_space<vmem>>, vector<16x32xf32>,
    } else {
    }
    return
  }
  func.func @transform_0(%arg0: i32, %arg1: i32, %arg2: i32, %arg3: memref<16xi32, #tpu.memory_space<smem>>, %arg4: memref<16xi32, #tpu.memory_space<smem>>) -> (i32, i32) {
    %c0_i32 = arith.constant 0 : i32
    %c0_i32_0 = arith.constant 0 : i32
    return %arg0, %c0_i32 : i32, i32
  }
  func.func @transform_1(%arg0: i32, %arg1: i32, %arg2: i32, %arg3: memref<16xi32, #tpu.memory_space<smem>>, %arg4: memref<16xi32, #tpu.memory_space<smem>>) -> (i32, i32) {
    %c0_i32 = arith.constant 0 : i32
    %c0_i32_0 = arith.constant 0 : i32
    return %arg0, %c0_i32 : i32, i32
  }
  func.func @transform_2(%arg0: i32, %arg1: i32, %arg2: i32, %arg3: memref<16xi32, #tpu.memory_space<smem>>, %arg4: memref<16xi32, #tpu.memory_space<smem>>) -> (i32, i32, i32) {
    %c16_i32 = arith.constant 16 : i32
    %0 = arith.muli %arg0, %c16_i32 : i32
    %1 = arith.addi %0, %arg1 : i32
    %2 = arith.index_cast %1 : i32 to index
    %3 = memref.load %arg4[%2] : memref<16xi32, #tpu.memory_space<smem>>
    %4 = arith.index_cast %1 : i32 to index
    %5 = memref.load %arg3[%4] : memref<16xi32, #tpu.memory_space<smem>>
    %6 = arith.muli %arg2, %5 : i32
    %c1_i32 = arith.constant 1 : i32
    %7 = arith.subi %c1_i32, %5 : i32
    %c0_i32 = arith.constant 0 : i32
    %8 = arith.muli %c0_i32, %7 : i32
    %9 = arith.addi %6, %8 : i32
    %c0_i32_0 = arith.constant 0 : i32
    %c0_i32_1 = arith.constant 0 : i32
    return %3, %c0_i32_0, %9 : i32, i32, i32
  }
  func.func @transform_3(%arg0: i32, %arg1: i32, %arg2: i32, %arg3: memref<16xi32, #tpu.memory_space<smem>>, %arg4: memref<16xi32, #tpu.memory_space<smem>>) -> (i32, i32, i32) {
    %c16_i32 = arith.constant 16 : i32
    %0 = arith.muli %arg0, %c16_i32 : i32
    %1 = arith.addi %0, %arg1 : i32
    %2 = arith.index_cast %1 : i32 to index
    %3 = memref.load %arg4[%2] : memref<16xi32, #tpu.memory_space<smem>>
    %4 = arith.index_cast %1 : i32 to index
    %5 = memref.load %arg3[%4] : memref<16xi32, #tpu.memory_space<smem>>
    %6 = arith.muli %arg2, %5 : i32
    %c1_i32 = arith.constant 1 : i32
    %7 = arith.subi %c1_i32, %5 : i32
    %c0_i32 = arith.constant 0 : i32
    %8 = arith.muli %c0_i32, %7 : i32
    %9 = arith.addi %6, %8 : i32
    %c0_i32_0 = arith.constant 0 : i32
    %c0_i32_1 = arith.constant 0 : i32
    return %3, %c0_i32_0, %9 : i32, i32, i32
  }
  func.func @transform_4(%arg0: i32, %arg1: i32, %arg2: i32, %arg3: memref<16xi32, #tpu.memory_space<smem>>, %arg4: memref<16xi32, #tpu.memory_space<smem>>) -> (i32, i32, i32) {
    %c16_i32 = arith.constant 16 : i32
    %0 = arith.muli %arg0, %c16_i32 : i32
    %1 = arith.addi %0, %arg1 : i32
    %2 = arith.index_cast %1 : i32 to index
    %3 = memref.load %arg4[%2] : memref<16xi32, #tpu.memory_space<smem>>
    %4 = arith.index_cast %1 : i32 to index
    %5 = memref.load %arg3[%4] : memref<16xi32, #tpu.memory_space<smem>>
    %6 = arith.muli %arg2, %5 : i32
    %c1_i32 = arith.constant 1 : i32
    %7 = arith.subi %c1_i32, %5 : i32
    %c0_i32 = arith.constant 0 : i32
    %8 = arith.muli %c0_i32, %7 : i32
    %9 = arith.addi %6, %8 : i32
    %c0_i32_0 = arith.constant 0 : i32
    %c0_i32_1 = arith.constant 0 : i32
    return %3, %9, %c0_i32_0 : i32, i32, i32
  }
  func.func @transform_5(%arg0: i32, %arg1: i32, %arg2: i32, %arg3: memref<16xi32, #tpu.memory_space<smem>>, %arg4: memref<16xi32, #tpu.memory_space<smem>>) -> (i32, i32, i32) {
    %c16_i32 = arith.constant 16 : i32
    %0 = arith.muli %arg0, %c16_i32 : i32
    %1 = arith.addi %0, %arg1 : i32
    %2 = arith.index_cast %1 : i32 to index
    %3 = memref.load %arg4[%2] : memref<16xi32, #tpu.memory_space<smem>>
    %c0_i32 = arith.constant 0 : i32
    %c0_i32_0 = arith.constant 0 : i32
    %c0_i32_1 = arith.constant 0 : i32
    return %3, %c0_i32, %c0_i32_0 : i32, i32, i32
  }
  func.func @transform_6(%arg0: i32, %arg1: i32, %arg2: i32, %arg3: memref<16xi32, #tpu.memory_space<smem>>, %arg4: memref<16xi32, #tpu.memory_space<smem>>) -> (i32, i32) {
    %c0_i32 = arith.constant 0 : i32
    %c0_i32_0 = arith.constant 0 : i32
    return %arg0, %c0_i32 : i32, i32
  }
}

</mosaic_0001>

<llo_original>
// kernel: enhanced_hierarchical_moe_forward.2
$region0: #{enhanced_hierarchical_moe_forward.2}
  #allocation0 [shape = 'u32[]', space=smem, size = 0x4, offset = 0x4, fixed_abs, tag = 'smem constant byte address 0x4 - core index']
  #allocation1 [shape = 'u32[144,128]{1,0:T(1,128)}', space=vmem, size = 0x12000, scoped, tag = 'internal scratch']
  #allocation2 [shape = 'f32[1,1]{1,0:T(1,128)S(1)}', space=vmem, size = 0x200, scoped, tag = 'scoped memory for enhanced_hierarchical_moe_forward.2']
  %s0 = inlined_call_operand.vmem [shape: bf16[16,32], index: 0, kind: input, shape index: {}]
  %s1 = inlined_call_operand.vmem [shape: bf16[32,256], index: 1, kind: input, shape index: {}]
  %s2 = inlined_call_operand.vmem [shape: f32[1,256], index: 2, kind: input, shape index: {}]
  %s3 = inlined_call_operand.vmem [shape: f32[1,128], index: 3, kind: input, shape index: {}]
  %s4 = inlined_call_operand.<no memory space> [shape: f32[1,1], index: 4, kind: input, shape index: {}]
  %s5 = inlined_call_operand.vmem [shape: f32[16,128], index: 5, kind: output, shape index: {}]
  %s6 = sld [smem:[#allocation0]]
  $region30: #{enhanced_hierarchical_moe_forward.2} parent=0
    _
  %s8 = ssub.s32 1, %s6
  %s9 = scalar_select 0, %s8, %s6
  %v10 = vstv %s4
  %11 = vst [vmem:[#allocation2] sm:$0x1] %v10
  // Predicated region
  $region2: #{enhanced_hierarchical_moe_forward.2} parent=0 // pred_check
    _
  $region3: #{enhanced_hierarchical_moe_forward.2} parent=0 // pred_check_branch
    %13 = sbr.rel (0) target = $region5
  $region4: #{enhanced_hierarchical_moe_forward.2} parent=0 // pred_region
    _
  $region5: #{enhanced_hierarchical_moe_forward.2} parent=0 // pred_fallthru
    _
  // Predicated region
  $region6: #{enhanced_hierarchical_moe_forward.2} parent=0 // pred_check
    _
  $region7: #{enhanced_hierarchical_moe_forward.2} parent=0 // pred_check_branch
    %15 = sbr.rel (0) target = $region9
  $region8: #{enhanced_hierarchical_moe_forward.2} parent=0 // pred_region
    _
  $region9: #{enhanced_hierarchical_moe_forward.2} parent=0 // pred_fallthru
    _
  // Predicated region
  $region10: #{enhanced_hierarchical_moe_forward.2} parent=0 // pred_check
    _
  $region11: #{enhanced_hierarchical_moe_forward.2} parent=0 // pred_check_branch
    %17 = sbr.rel (0) target = $region13
  $region12: #{enhanced_hierarchical_moe_forward.2} parent=0 // pred_region
    _
  $region13: #{enhanced_hierarchical_moe_forward.2} parent=0 // pred_fallthru
    _
  // Predicated region
  $region14: #{enhanced_hierarchical_moe_forward.2} parent=0 // pred_check
    _
  $region15: #{enhanced_hierarchical_moe_forward.2} parent=0 // pred_check_branch
    %19 = sbr.rel (0) target = $region17
  $region16: #{enhanced_hierarchical_moe_forward.2} parent=0 // pred_region
    _
  $region17: #{enhanced_hierarchical_moe_forward.2} parent=0 // pred_fallthru
    _
  // Predicated region
  $region18: #{enhanced_hierarchical_moe_forward.2} parent=0 // pred_check
    _
  $region19: #{enhanced_hierarchical_moe_forward.2} parent=0 // pred_check_branch
    %21 = sbr.rel (0) target = $region21
  $region20: #{enhanced_hierarchical_moe_forward.2} parent=0 // pred_region
    _
  $region21: #{enhanced_hierarchical_moe_forward.2} parent=0 // pred_fallthru
    _
  %v23 = vld [vmem:[%s0] sm:$0xf]
  %v24 = vld [vmem:[%s0 + $0x4] sm:$0xf]
  %v25 = vld [vmem:[%s1] sm:$0xff]
  %v26 = vld [vmem:[%s1 + $0x8] sm:$0xff]
  %v27 = vld [vmem:[%s1 + $0x10] sm:$0xff]
  %v28 = vld [vmem:[%s1 + $0x18] sm:$0xff]
  %v29 = vld [vmem:[%s2] sm:$0x3]
  %v31 = vlaneseq
  %v32 = vshrl.u32 %v31, 7
  %v33 = vsub.s32 0, %v32
  %v34 = vrot.slane %v29, %v33
  %v35 = vlaneseq
  %v36 = vshrl.u32 %v35, 7
  %v37 = vsub.s32 1, %v36
  %v38 = vrot.slane %v29, %v37
  %v43 = vunpack.c.l.b16 %v23
  %v44 = vunpack.c.l.b16 %v24
  %v45 = vpack.c.b16 %v44, %v43
  %v50 = vunpack.c.l.b16 %v25
  %v51 = vunpack.c.h.b16 %v25
  %v52 = vunpack.c.l.b16 %v26
  %v53 = vunpack.c.h.b16 %v26
  %v54 = vunpack.c.l.b16 %v27
  %v55 = vunpack.c.h.b16 %v27
  %v56 = vunpack.c.l.b16 %v28
  %v57 = vunpack.c.h.b16 %v28
  %v58 = vpack.c.b16 %v52, %v50
  %v59 = vpack.c.b16 %v53, %v51
  %v60 = vpack.c.b16 %v56, %v54
  %v61 = vpack.c.b16 %v57, %v55
  %vm66 = vcmask 261120
  %v68 = vsel %vm66, %v45, 0
  %70 = vmatprep.subr.bf16.mxu0 0
  %71 = vmatpush1.bf16.msra.mxu0 0
  %72 = vmatprep.subr.bf16.mxu0 0
  %73 = vmatpush1.bf16.msra.mxu0 0
  %74 = vmatprep.subr.bf16.mxu0 0
  %75 = vmatpush1.bf16.msra.mxu0 0
  %76 = vmatprep.subr.bf16.mxu0 0
  %77 = vmatpush1.bf16.msra.mxu0 0
  %78 = vmatprep.subr.bf16.mxu0 0
  %79 = vmatpush1.bf16.msra.mxu0 0
  %80 = vmatprep.subr.bf16.mxu0 0
  %81 = vmatpush1.bf16.msra.mxu0 0
  %82 = vmatprep.subr.bf16.mxu0 %v61
  %83 = vmatpush1.bf16.msra.mxu0 %v60
  %84 = vmatprep.subr.bf16.mxu0 %v59
  %85 = vmatpush1.bf16.msra.mxu0 %v58
  %86 = vmatprep.subr.bf16.mxu0 0
  %87 = vmatpush2.bf16.msra.mxu0 0
  %88 = vmatprep.subr.bf16.mxu0 0
  %89 = vmatpush2.bf16.msra.mxu0 0
  %90 = vmatprep.subr.bf16.mxu0 0
  %91 = vmatpush2.bf16.msra.mxu0 0
  %92 = vmatprep.subr.bf16.mxu0 0
  %93 = vmatpush2.bf16.msra.mxu0 0
  %94 = vmatprep.subr.bf16.mxu0 0
  %95 = vmatpush2.bf16.msra.mxu0 0
  %96 = vmatprep.subr.bf16.mxu0 0
  %97 = vmatpush2.bf16.msra.mxu0 0
  %98 = vmatprep.subr.bf16.mxu0 0
  %99 = vmatpush2.bf16.msra.mxu0 0
  %100 = vmatprep.subr.bf16.mxu0 0
  %101 = vmatpush2.bf16.msra.mxu0 0
  %102 = vmatprep.mubr.bf16.mxu0 0
  %103 = vmatmul.mubr.bf16.gmra.mxu0 %v68
  %v104 = vpop.f32.mrf.mxu0
  %v105 = vadd.f32 %v34, %v104
  %v106 = vpop.f32.mrf.mxu0
  %v107 = vadd.f32 %v38, %v106
  %v108 = vpop.f32.mrf.mxu0
  %v109 = vadd.f32 %v34, %v108
  %v110 = vpop.f32.mrf.mxu0
  %v111 = vadd.f32 %v38, %v110
  %112 = vdwg.mxu0
  %v113 = vmul.f32 %v105, 0.5
  %v114 = vmul.f32 %v109, 0.5
  %v115 = vmul.f32 %v105, 0.70710677
  %v116 = vmul.f32 %v109, 0.70710677
  %vm117 = vcmp.ge.f32.partialorder %v115, 0.0
  %vm118 = vcmp.ge.f32.partialorder %v116, 0.0
  %v119 = vsel %vm117, 1.0, -1.0
  %v120 = vsel %vm118, 1.0, -1.0
  %v121 = vand.u32 2147483647, %v115
  %v122 = vand.u32 2147483647, %v116
  %v123 = vmul.f32 %v121, 0.3275911
  %v124 = vmul.f32 %v122, 0.3275911
  %v125 = vadd.f32 %v123, 1.0
  %v126 = vadd.f32 %v124, 1.0
  %v127 = vrcp.pop %v125
  %v128 = vmul.f32 1.0, %v127
  %v129 = vrcp.pop %v126
  %v130 = vmul.f32 1.0, %v129
  %v131 = vmul.f32 %v128, 1.0614054
  %v132 = vmul.f32 %v130, 1.0614054
  %v133 = vadd.f32 %v131, -1.4531521
  %v134 = vadd.f32 %v132, -1.4531521
  %v135 = vmul.f32 %v133, %v128
  %v136 = vmul.f32 %v134, %v130
  %v137 = vadd.f32 %v135, 1.4214138
  %v138 = vadd.f32 %v136, 1.4214138
  %v139 = vmul.f32 %v137, %v128
  %v140 = vmul.f32 %v138, %v130
  %v141 = vadd.f32 %v139, -0.28449672
  %v142 = vadd.f32 %v140, -0.28449672
  %v143 = vmul.f32 %v141, %v128
  %v144 = vmul.f32 %v142, %v130
  %v145 = vadd.f32 %v143, 0.2548296
  %v146 = vadd.f32 %v144, 0.2548296
  %v147 = vmul.f32 %v145, %v128
  %v148 = vmul.f32 %v146, %v130
  %v149 = vsub.f32 0.0, %v121
  %v150 = vsub.f32 0.0, %v122
  %v151 = vmul.f32 %v149, %v121
  %v152 = vmul.f32 %v150, %v122
  %v153 = vmul.f32 %v151, 1.442695
  %v154 = vpow.pop %v153
  %v155 = vmul.f32 %v152, 1.442695
  %v156 = vpow.pop %v155
  %v157 = vmul.f32 %v147, %v154
  %v158 = vmul.f32 %v148, %v156
  %v159 = vsub.f32 1.0, %v157
  %v160 = vsub.f32 1.0, %v158
  %v161 = vmul.f32 %v119, %v159
  %v162 = vmul.f32 %v120, %v160
  %v163 = vadd.f32 %v161, 1.0
  %v164 = vadd.f32 %v162, 1.0
  %v165 = vmul.f32 %v113, %v163
  %v166 = vmul.f32 %v114, %v164
  %v167 = vld [vmem:[%s3] sm:$0x1]
  %v169 = vlaneseq
  %v170 = vshrl.u32 %v169, 7
  %v171 = vsub.s32 0, %v170
  %v172 = vrot.slane %v167, %v171
  %v174 = vmul.f32 %v165, %v172
  %v175 = vmul.f32 %v166, %v172
  %176 = vadd.xlane.f32.xlu0 %v174
  %v177 = vpop.xlane.xlu0 %176
  %178 = vadd.xlane.f32.xlu0 %v175
  %v179 = vpop.xlane.xlu0 %178
  %v180 = vld [vmem:[#allocation2] sm:$0x1]
  %v182 = vlaneseq
  %v183 = vshrl.u32 %v182, 7
  %v184 = vsub.s32 0, %v183
  %v185 = vrot.slane %v180, %v184
  %v187 = vadd.f32 %v177, %v185
  %v188 = vadd.f32 %v179, %v185
  %v189 = vxor.u32 %v187, 2147483648
  %v190 = vxor.u32 %v188, 2147483648
  %v191 = vmul.f32 %v189, 1.442695
  %v192 = vpow.pop %v191
  %v193 = vmul.f32 %v190, 1.442695
  %v194 = vpow.pop %v193
  %v195 = vadd.f32 %v192, 1.0
  %v196 = vadd.f32 %v194, 1.0
  %v197 = vrcp.pop %v195
  %v198 = vmul.f32 1.0, %v197
  %v199 = vrcp.pop %v196
  %v200 = vmul.f32 1.0, %v199
  %v201 = vlaneseq
  %v202 = vand.u32 %v201, 127
  %vm203 = vcmp.lt.s32.totalorder %v202, 4
  %v204 = vsel %vm203, %v107, -inf
  %v205 = vsel %vm203, %v111, -inf
  %206 = vmax.xlane.f32.xlu0 %v204
  %v207 = vpop.xlane.xlu0 %206
  %208 = vmax.xlane.f32.xlu0 %v205
  %v209 = vpop.xlane.xlu0 %208
  %v210 = vsub.f32 %v204, %v207
  %v211 = vsub.f32 %v205, %v209
  %v212 = vmul.f32 %v210, 1.442695
  %v213 = vpow.pop %v212
  %v214 = vmul.f32 %v211, 1.442695
  %v215 = vpow.pop %v214
  %216 = vadd.xlane.f32.xlu0 %v213
  %v217 = vpop.xlane.xlu0 %216
  %218 = vadd.xlane.f32.xlu0 %v215
  %v219 = vpop.xlane.xlu0 %218
  %v220 = vrcp.pop %v217
  %v221 = vmul.f32 %v213, %v220
  %v222 = vrcp.pop %v219
  %v223 = vmul.f32 %v215, %v222
  %vm224 = vcmp.ge.s32.totalorder %v202, 4
  %vm225 = vcmp.lt.s32.totalorder %v202, 8
  %vm226 = vmand %vm224, %vm225
  %v227 = vsel %vm226, %v107, -inf
  %v228 = vsel %vm226, %v111, -inf
  %229 = vmax.xlane.f32.xlu0 %v227
  %v230 = vpop.xlane.xlu0 %229
  %231 = vmax.xlane.f32.xlu0 %v228
  %v232 = vpop.xlane.xlu0 %231
  %v233 = vsub.f32 %v227, %v230
  %v234 = vsub.f32 %v228, %v232
  %v235 = vmul.f32 %v233, 1.442695
  %v236 = vpow.pop %v235
  %v237 = vmul.f32 %v234, 1.442695
  %v238 = vpow.pop %v237
  %239 = vadd.xlane.f32.xlu0 %v236
  %v240 = vpop.xlane.xlu0 %239
  %241 = vadd.xlane.f32.xlu0 %v238
  %v242 = vpop.xlane.xlu0 %241
  %v243 = vrcp.pop %v240
  %v244 = vmul.f32 %v236, %v243
  %v245 = vrcp.pop %v242
  %v246 = vmul.f32 %v238, %v245
  %v247 = vadd.f32 %v244, 0.0
  %v248 = vadd.f32 %v246, 0.0
  %vm249 = vcmp.ge.s32.totalorder %v202, 8
  %vm250 = vcmp.lt.s32.totalorder %v202, 12
  %vm251 = vmand %vm249, %vm250
  %v252 = vsel %vm251, %v107, -inf
  %v253 = vsel %vm251, %v111, -inf
  %254 = vmax.xlane.f32.xlu0 %v252
  %v255 = vpop.xlane.xlu0 %254
  %256 = vmax.xlane.f32.xlu0 %v253
  %v257 = vpop.xlane.xlu0 %256
  %v258 = vsub.f32 %v252, %v255
  %v259 = vsub.f32 %v253, %v257
  %v260 = vmul.f32 %v258, 1.442695
  %v261 = vpow.pop %v260
  %v262 = vmul.f32 %v259, 1.442695
  %v263 = vpow.pop %v262
  %264 = vadd.xlane.f32.xlu0 %v261
  %v265 = vpop.xlane.xlu0 %264
  %266 = vadd.xlane.f32.xlu0 %v263
  %v267 = vpop.xlane.xlu0 %266
  %v268 = vrcp.pop %v265
  %v269 = vmul.f32 %v261, %v268
  %v270 = vrcp.pop %v267
  %v271 = vmul.f32 %v263, %v270
  %v272 = vadd.f32 %v247, %v269
  %v273 = vadd.f32 %v248, %v271
  %vm274 = vcmp.ge.s32.totalorder %v202, 12
  %vm275 = vcmp.lt.s32.totalorder %v202, 16
  %vm276 = vmand %vm274, %vm275
  %v277 = vsel %vm276, %v107, -inf
  %v278 = vsel %vm276, %v111, -inf
  %279 = vmax.xlane.f32.xlu0 %v277
  %v280 = vpop.xlane.xlu0 %279
  %281 = vmax.xlane.f32.xlu0 %v278
  %v282 = vpop.xlane.xlu0 %281
  %v283 = vsub.f32 %v277, %v280
  %v284 = vsub.f32 %v278, %v282
  %v285 = vmul.f32 %v283, 1.442695
  %v286 = vpow.pop %v285
  %v287 = vmul.f32 %v284, 1.442695
  %v288 = vpow.pop %v287
  %289 = vadd.xlane.f32.xlu0 %v286
  %v290 = vpop.xlane.xlu0 %289
  %291 = vadd.xlane.f32.xlu0 %v288
  %v292 = vpop.xlane.xlu0 %291
  %v293 = vrcp.pop %v290
  %v294 = vmul.f32 %v286, %v293
  %v295 = vrcp.pop %v292
  %v296 = vmul.f32 %v288, %v295
  %v297 = vadd.f32 %v272, %v294
  %v298 = vadd.f32 %v273, %v296
  %vm299 = vcmp.ge.s32.totalorder %v202, 16
  %vm300 = vcmp.lt.s32.totalorder %v202, 20
  %vm301 = vmand %vm299, %vm300
  %v302 = vsel %vm301, %v107, -inf
  %v303 = vsel %vm301, %v111, -inf
  %304 = vmax.xlane.f32.xlu0 %v302
  %v305 = vpop.xlane.xlu0 %304
  %306 = vmax.xlane.f32.xlu0 %v303
  %v307 = vpop.xlane.xlu0 %306
  %v308 = vsub.f32 %v302, %v305
  %v309 = vsub.f32 %v303, %v307
  %v310 = vmul.f32 %v308, 1.442695
  %v311 = vpow.pop %v310
  %v312 = vmul.f32 %v309, 1.442695
  %v313 = vpow.pop %v312
  %314 = vadd.xlane.f32.xlu0 %v311
  %v315 = vpop.xlane.xlu0 %314
  %316 = vadd.xlane.f32.xlu0 %v313
  %v317 = vpop.xlane.xlu0 %316
  %v318 = vrcp.pop %v315
  %v319 = vmul.f32 %v311, %v318
  %v320 = vrcp.pop %v317
  %v321 = vmul.f32 %v313, %v320
  %v322 = vadd.f32 %v297, %v319
  %v323 = vadd.f32 %v298, %v321
  %v324 = vadd.f32 %v221, %v322
  %v325 = vadd.f32 %v223, %v323
  %vm326 = vcmp.eq.s32.totalorder %v202, 20
  %328 = vset.pattern.permute.xlu0 0
  %329 = vperm.xlu0 %328, %v198
  %v330 = vpop.permute.xlu0 %329
  %333 = vset.pattern.permute.xlu0 0
  %334 = vperm.xlu0 %333, %v200
  %v335 = vpop.permute.xlu0 %334
  %v337 = vsel %vm326, %v330, 0.0
  %v338 = vsel %vm326, %v335, 0.0
  %v339 = vadd.f32 %v324, %v337
  %v340 = vadd.f32 %v325, %v338
  %341 = vst [vmem:[%s5] sm:$0xff] %v339
  %342 = vst [vmem:[%s5 + $0x8] sm:$0xff] %v340
  // Predicated region
  $region22: #{enhanced_hierarchical_moe_forward.2} parent=0 // pred_check
    _
  $region23: #{enhanced_hierarchical_moe_forward.2} parent=0 // pred_check_branch
    %344 = sbr.rel (0) target = $region25
  $region24: #{enhanced_hierarchical_moe_forward.2} parent=0 // pred_region
    _
  $region25: #{enhanced_hierarchical_moe_forward.2} parent=0 // pred_fallthru
    _
  // Predicated region
  $region26: #{enhanced_hierarchical_moe_forward.2} parent=0 // pred_check
    _
  $region27: #{enhanced_hierarchical_moe_forward.2} parent=0 // pred_check_branch
    %346 = sbr.rel (0) target = $region29
  $region28: #{enhanced_hierarchical_moe_forward.2} parent=0 // pred_region
    _
  $region29: #{enhanced_hierarchical_moe_forward.2} parent=0 // pred_fallthru
    _

// kernel: enhanced_hierarchical_moe_forward.3
$region0: #{enhanced_hierarchical_moe_forward.3}
  #allocation0 [shape = 'u32[]', space=smem, size = 0x4, offset = 0x4, fixed_abs, tag = 'smem constant byte address 0x4 - core index']
  #allocation1 [shape = 'u32[144,128]{1,0:T(1,128)}', space=vmem, size = 0x12000, scoped, tag = 'internal scratch']
  #allocation2 [shape = 's32[1]{0}', space=sflag, size = 0x4, scoped, tag = 'scoped memory for enhanced_hierarchical_moe_forward.3']
  #allocation3 [shape = 'u8[512]{0}', space=smem, size = 0x200, scoped, tag = 'prefetched SMEM operand 0']
  #allocation4 [shape = 'u8[512]{0}', space=smem, size = 0x200, scoped, tag = 'prefetched SMEM operand 1']
  %s0 = inlined_call_operand.vmem [shape: s32[16], index: 0, kind: input, shape index: {}]
  %s1 = inlined_call_operand.vmem [shape: s32[16], index: 1, kind: input, shape index: {}]
  %s2 = inlined_call_operand.vmem [shape: bf16[16,32], index: 2, kind: input, shape index: {}]
  %s3 = inlined_call_operand.vmem [shape: f32[16,128], index: 3, kind: input, shape index: {}]
  %s4 = inlined_call_operand.vmem [shape: bf16[16,32,64], index: 4, kind: input, shape index: {}]
  %s5 = inlined_call_operand.vmem [shape: f32[16,1,64], index: 5, kind: input, shape index: {}]
  %s6 = inlined_call_operand.vmem [shape: bf16[16,64,32], index: 6, kind: input, shape index: {}]
  %s7 = inlined_call_operand.vmem [shape: f32[16,1,32], index: 7, kind: input, shape index: {}]
  %s8 = inlined_call_operand.hbm [shape: f32[16,32], index: 8, kind: output, shape index: {}]
  %s9 = sld [smem:[#allocation0]]
  $region65: #{enhanced_hierarchical_moe_forward.3} parent=0
    _
  %s11 = ssub.s32 1, %s9
  %s12 = scalar_select 0, %s11, %s9
  %s13 = sshll.u32 %s0, 4
  %s14 = int_to_ptr.vmem [resolvable:$true] %s13
  %16 = dma.vmem_to_smem %s14, 16, [#allocation3], [#allocation2]
  %s17 = sshll.u32 %s1, 4
  %s18 = int_to_ptr.vmem [resolvable:$true] %s17
  %20 = dma.vmem_to_smem %s18, 16, [#allocation4], [#allocation2]
  %21 = dma.done [#allocation2], 32
  %22 = sfence
  $region1: #{enhanced_hierarchical_moe_forward.3} parent=0
    #allocation5 [shape = 'u8[8192]{0}', space=vmem, size = 0x2000, scoped, tag = 'output window, operand 0, single buffered']
    #allocation6 [shape = 's32[2]{0}', space=sflag, size = 0x8, scoped, tag = 'scoped memory for enhanced_hierarchical_moe_forward.3']
    %23 = vsyncpa [#allocation6], 0
    loop: start=0, step=1, limit=18
    $region2: #{enhanced_hierarchical_moe_forward.3} parent=1 // loop_pre_header
      _
    $region3: #{enhanced_hierarchical_moe_forward.3} parent=1 // loop_header
      %s25 = sphi 0, %s29
      %p26 = scmp.ge.s32.totalorder %s25, 18
      %s32 = sphi 0, %s51
      %s33 = sphi 0, %s47
      %s34 = sphi 0, %s43
      %s35 = sphi 0, %s32
      %s36 = sphi 0, %s33
      %s37 = sphi 0, %s34
      %s38 = sphi 0, %s35
      %s39 = sphi 0, %s36
      %s40 = sphi 0, %s37
      %s54 = sphi 0, %s56
      %s57 = sphi 0, %s54
      %s58 = sphi 0, %s57
      %s74 = sphi 0, %s58
      %s80 = sphi 0, %s82
      %s83 = sphi 0, %s80
      %s84 = sphi 0, %s83
      %s100 = sphi 0, %s84
      %s118 = sphi 0, %s120
      %s121 = sphi 0, %s118
      %s122 = sphi 0, %s121
      %s138 = sphi 0, %s122
      %s156 = sphi 0, %s158
      %s159 = sphi 0, %s156
      %s160 = sphi 0, %s159
      %s176 = sphi 0, %s160
      %s194 = sphi 0, %s196
      %s197 = sphi 0, %s194
      %s198 = sphi 0, %s197
      %s214 = sphi 0, %s198
      %s226 = sphi 0, %s228
      %s229 = sphi 0, %s226
      %s230 = sphi 0, %s229
      %s246 = sphi 0, %s230
      %s252 = sphi 0, %s254
      %s255 = sphi 0, %s252
      %s256 = sphi 0, %s255
      %s272 = sphi 0, %s256
    $region4: #{enhanced_hierarchical_moe_forward.3} parent=1 // loop_header_branch
      %28 = sbr.rel (%p26) target = $region8
    $region5: #{enhanced_hierarchical_moe_forward.3} parent=1 // loop_body
      %s30 = ssub.s32 %s25, 1
      %s31 = ssub.s32 %s25, 2
      %s41 = sadd.s32 1, %s34
      %p42 = scmp.ge.s32.totalorder %s41, 1
      %s43 = scalar_select %p42, 0, %s41
      %s44 = sadd.s32 1, %s33
      %s45 = scalar_select %p42, %s44, %s33
      %p46 = scmp.ge.s32.totalorder %s45, 16
      %s47 = scalar_select %p46, 0, %s45
      %s48 = sadd.s32 1, %s32
      %s49 = scalar_select %p46, %s48, %s32
      %p50 = scmp.ge.s32.totalorder %s49, 1
      %s51 = scalar_select %p50, 0, %s49
      %s52 = ssub.s32 %s32, %s51
      %p53 = scmp.eq.s32.totalorder %s52, 0
      %s55 = sadd.s32 %s54, 1
      %s56 = scalar_select %p53, %s54, %s55
      %p59 = pneg %p53
      %p60 = scmp.eq.s32.totalorder %s25, 15
      %p61 = por %p59, %p60
      %p62 = scmp.ne.s32.totalorder %s54, %s57
      %p63 = scmp.eq.s32.totalorder %s25, 0
      %p64 = por %p62, %p63
      %p65 = scmp.ne.s32.totalorder %s54, %s57
      %p66 = scmp.eq.s32.totalorder %s30, 15
      %p67 = por %p65, %p66
      %p68 = scmp.ne.s32.totalorder %s57, %s58
      %p69 = scmp.eq.s32.totalorder %s30, 0
      %p70 = por %p68, %p69
      %p71 = scmp.ne.s32.totalorder %s57, %s58
      %p72 = scmp.eq.s32.totalorder %s31, 15
      %p73 = por %p71, %p72
      %p75 = scmp.ne.s32.totalorder %s58, %s74
      %p76 = scmp.eq.s32.totalorder %s31, 0
      %p77 = por %p75, %p76
      %s78 = ssub.s32 %s32, %s51
      %p79 = scmp.eq.s32.totalorder %s78, 0
      %s81 = sadd.s32 %s80, 1
      %s82 = scalar_select %p79, %s80, %s81
      %p85 = pneg %p79
      %p86 = scmp.eq.s32.totalorder %s25, 15
      %p87 = por %p85, %p86
      %p88 = scmp.ne.s32.totalorder %s80, %s83
      %p89 = scmp.eq.s32.totalorder %s25, 0
      %p90 = por %p88, %p89
      %p91 = scmp.ne.s32.totalorder %s80, %s83
      %p92 = scmp.eq.s32.totalorder %s30, 15
      %p93 = por %p91, %p92
      %p94 = scmp.ne.s32.totalorder %s83, %s84
      %p95 = scmp.eq.s32.totalorder %s30, 0
      %p96 = por %p94, %p95
      %p97 = scmp.ne.s32.totalorder %s83, %s84
      %p98 = scmp.eq.s32.totalorder %s31, 15
      %p99 = por %p97, %p98
      %p101 = scmp.ne.s32.totalorder %s84, %s100
      %p102 = scmp.eq.s32.totalorder %s31, 0
      %p103 = por %p101, %p102
      %s104 = smul.u32 %s32, 16
      %s105 = sadd.s32 %s104, %s33
      %s106 = sld [smem:[#allocation4 + %s105]]
      %s107 = sld [smem:[#allocation3 + %s105]]
      %s108 = smul.u32 %s34, %s107
      %s109 = smul.u32 %s51, 16
      %s110 = sadd.s32 %s109, %s47
      %s111 = sld [smem:[#allocation4 + %s110]]
      %s112 = sld [smem:[#allocation3 + %s110]]
      %s113 = smul.u32 %s43, %s112
      %s114 = ssub.s32 %s106, %s111
      %s115 = ssub.s32 %s108, %s113
      %s116 = sor.u32 %s114, %s115
      %p117 = scmp.eq.s32.totalorder %s116, 0
      %s119 = sadd.s32 %s118, 1
      %s120 = scalar_select %p117, %s118, %s119
      %p123 = pneg %p117
      %p124 = scmp.eq.s32.totalorder %s25, 15
      %p125 = por %p123, %p124
      %p126 = scmp.ne.s32.totalorder %s118, %s121
      %p127 = scmp.eq.s32.totalorder %s25, 0
      %p128 = por %p126, %p127
      %p129 = scmp.ne.s32.totalorder %s118, %s121
      %p130 = scmp.eq.s32.totalorder %s30, 15
      %p131 = por %p129, %p130
      %p132 = scmp.ne.s32.totalorder %s121, %s122
      %p133 = scmp.eq.s32.totalorder %s30, 0
      %p134 = por %p132, %p133
      %p135 = scmp.ne.s32.totalorder %s121, %s122
      %p136 = scmp.eq.s32.totalorder %s31, 15
      %p137 = por %p135, %p136
      %p139 = scmp.ne.s32.totalorder %s122, %s138
      %p140 = scmp.eq.s32.totalorder %s31, 0
      %p141 = por %p139, %p140
      %s142 = smul.u32 %s32, 16
      %s143 = sadd.s32 %s142, %s33
      %s144 = sld [smem:[#allocation4 + %s143]]
      %s145 = sld [smem:[#allocation3 + %s143]]
      %s146 = smul.u32 %s34, %s145
      %s147 = smul.u32 %s51, 16
      %s148 = sadd.s32 %s147, %s47
      %s149 = sld [smem:[#allocation4 + %s148]]
      %s150 = sld [smem:[#allocation3 + %s148]]
      %s151 = smul.u32 %s43, %s150
      %s152 = ssub.s32 %s144, %s149
      %s153 = ssub.s32 %s146, %s151
      %s154 = sor.u32 %s152, %s153
      %p155 = scmp.eq.s32.totalorder %s154, 0
      %s157 = sadd.s32 %s156, 1
      %s158 = scalar_select %p155, %s156, %s157
      %p161 = pneg %p155
      %p162 = scmp.eq.s32.totalorder %s25, 15
      %p163 = por %p161, %p162
      %p164 = scmp.ne.s32.totalorder %s156, %s159
      %p165 = scmp.eq.s32.totalorder %s25, 0
      %p166 = por %p164, %p165
      %p167 = scmp.ne.s32.totalorder %s156, %s159
      %p168 = scmp.eq.s32.totalorder %s30, 15
      %p169 = por %p167, %p168
      %p170 = scmp.ne.s32.totalorder %s159, %s160
      %p171 = scmp.eq.s32.totalorder %s30, 0
      %p172 = por %p170, %p171
      %p173 = scmp.ne.s32.totalorder %s159, %s160
      %p174 = scmp.eq.s32.totalorder %s31, 15
      %p175 = por %p173, %p174
      %p177 = scmp.ne.s32.totalorder %s160, %s176
      %p178 = scmp.eq.s32.totalorder %s31, 0
      %p179 = por %p177, %p178
      %s180 = smul.u32 %s32, 16
      %s181 = sadd.s32 %s180, %s33
      %s182 = sld [smem:[#allocation4 + %s181]]
      %s183 = sld [smem:[#allocation3 + %s181]]
      %s184 = smul.u32 %s34, %s183
      %s185 = smul.u32 %s51, 16
      %s186 = sadd.s32 %s185, %s47
      %s187 = sld [smem:[#allocation4 + %s186]]
      %s188 = sld [smem:[#allocation3 + %s186]]
      %s189 = smul.u32 %s43, %s188
      %s190 = ssub.s32 %s182, %s187
      %s191 = ssub.s32 %s184, %s189
      %s192 = sor.u32 %s190, %s191
      %p193 = scmp.eq.s32.totalorder %s192, 0
      %s195 = sadd.s32 %s194, 1
      %s196 = scalar_select %p193, %s194, %s195
      %p199 = pneg %p193
      %p200 = scmp.eq.s32.totalorder %s25, 15
      %p201 = por %p199, %p200
      %p202 = scmp.ne.s32.totalorder %s194, %s197
      %p203 = scmp.eq.s32.totalorder %s25, 0
      %p204 = por %p202, %p203
      %p205 = scmp.ne.s32.totalorder %s194, %s197
      %p206 = scmp.eq.s32.totalorder %s30, 15
      %p207 = por %p205, %p206
      %p208 = scmp.ne.s32.totalorder %s197, %s198
      %p209 = scmp.eq.s32.totalorder %s30, 0
      %p210 = por %p208, %p209
      %p211 = scmp.ne.s32.totalorder %s197, %s198
      %p212 = scmp.eq.s32.totalorder %s31, 15
      %p213 = por %p211, %p212
      %p215 = scmp.ne.s32.totalorder %s198, %s214
      %p216 = scmp.eq.s32.totalorder %s31, 0
      %p217 = por %p215, %p216
      %s218 = smul.u32 %s32, 16
      %s219 = sadd.s32 %s218, %s33
      %s220 = sld [smem:[#allocation4 + %s219]]
      %s221 = smul.u32 %s51, 16
      %s222 = sadd.s32 %s221, %s47
      %s223 = sld [smem:[#allocation4 + %s222]]
      %s224 = ssub.s32 %s220, %s223
      %p225 = scmp.eq.s32.totalorder %s224, 0
      %s227 = sadd.s32 %s226, 1
      %s228 = scalar_select %p225, %s226, %s227
      %p231 = pneg %p225
      %p232 = scmp.eq.s32.totalorder %s25, 15
      %p233 = por %p231, %p232
      %p234 = scmp.ne.s32.totalorder %s226, %s229
      %p235 = scmp.eq.s32.totalorder %s25, 0
      %p236 = por %p234, %p235
      %p237 = scmp.ne.s32.totalorder %s226, %s229
      %p238 = scmp.eq.s32.totalorder %s30, 15
      %p239 = por %p237, %p238
      %p240 = scmp.ne.s32.totalorder %s229, %s230
      %p241 = scmp.eq.s32.totalorder %s30, 0
      %p242 = por %p240, %p241
      %p243 = scmp.ne.s32.totalorder %s229, %s230
      %p244 = scmp.eq.s32.totalorder %s31, 15
      %p245 = por %p243, %p244
      %p247 = scmp.ne.s32.totalorder %s230, %s246
      %p248 = scmp.eq.s32.totalorder %s31, 0
      %p249 = por %p247, %p248
      %s250 = ssub.s32 %s32, %s51
      %p251 = scmp.eq.s32.totalorder %s250, 0
      %s253 = sadd.s32 %s252, 1
      %s254 = scalar_select %p251, %s252, %s253
      %p257 = pneg %p251
      %p258 = scmp.eq.s32.totalorder %s25, 15
      %p259 = por %p257, %p258
      %p260 = scmp.ne.s32.totalorder %s252, %s255
      %p261 = scmp.eq.s32.totalorder %s25, 0
      %p262 = por %p260, %p261
      %p263 = scmp.ne.s32.totalorder %s252, %s255
      %p264 = scmp.eq.s32.totalorder %s30, 15
      %p265 = por %p263, %p264
      %p266 = scmp.ne.s32.totalorder %s255, %s256
      %p267 = scmp.eq.s32.totalorder %s30, 0
      %p268 = por %p266, %p267
      %p269 = scmp.ne.s32.totalorder %s255, %s256
      %p270 = scmp.eq.s32.totalorder %s31, 15
      %p271 = por %p269, %p270
      %p273 = scmp.ne.s32.totalorder %s256, %s272
      %p274 = scmp.eq.s32.totalorder %s31, 0
      %p275 = por %p273, %p274
      %p276 = scmp.le.s32.totalorder 1, %s25
      %p277 = scmp.lt.s32.totalorder %s25, 17
      %p278 = pnand %p276, %p277
      %p279 = pneg %p278
      // Predicated region
      $region9: #{enhanced_hierarchical_moe_forward.3} parent=5 // pred_check
        _
      $region10: #{enhanced_hierarchical_moe_forward.3} parent=5 // pred_check_branch
        %281 = sbr.rel (%p278) target = $region12
      $region11: #{enhanced_hierarchical_moe_forward.3} parent=5 // pred_region
        %s282 = ssub.s32 %s25, 1
        // Predicated region
        $region13: #{enhanced_hierarchical_moe_forward.3} parent=11 // pred_check
          %p283 = pneg %p70
        $region14: #{enhanced_hierarchical_moe_forward.3} parent=11 // pred_check_branch
          %285 = sbr.rel (%p283) target = $region16
        $region15: #{enhanced_hierarchical_moe_forward.3} parent=11 // pred_region
          %s286 = smul.u32 2, %s35
          %p287 = scmp.lt.s32.totalorder %s286, 1
          %s288 = scalar_select %p287, %s286, 1
          %s289 = smul.addr %s288, 4
          %s290 = scalar_lea.vmem %s2, %s289
          %s291 = smul.u32 2, %s35
        $region16: #{enhanced_hierarchical_moe_forward.3} parent=11 // pred_fallthru
          _
        // Predicated region
        $region17: #{enhanced_hierarchical_moe_forward.3} parent=11 // pred_check
          %p292 = pneg %p96
        $region18: #{enhanced_hierarchical_moe_forward.3} parent=11 // pred_check_branch
          %294 = sbr.rel (%p292) target = $region20
        $region19: #{enhanced_hierarchical_moe_forward.3} parent=11 // pred_region
          %s295 = smul.u32 2, %s35
          %p296 = scmp.lt.s32.totalorder %s295, 1
          %s297 = scalar_select %p296, %s295, 1
          %s298 = smul.addr %s297, 8
          %s299 = scalar_lea.vmem %s3, %s298
          %s300 = smul.u32 2, %s35
        $region20: #{enhanced_hierarchical_moe_forward.3} parent=11 // pred_fallthru
          _
      $region12: #{enhanced_hierarchical_moe_forward.3} parent=5 // pred_fallthru
        _
      %p301 = scmp.lt.s32.totalorder %s25, 16
      // Predicated region
      $region21: #{enhanced_hierarchical_moe_forward.3} parent=5 // pred_check
        %p302 = pneg %p301
      $region22: #{enhanced_hierarchical_moe_forward.3} parent=5 // pred_check_branch
        %304 = sbr.rel (%p302) target = $region24
      $region23: #{enhanced_hierarchical_moe_forward.3} parent=5 // pred_region
        // Predicated region
        $region25: #{enhanced_hierarchical_moe_forward.3} parent=23 // pred_check
          %p305 = pneg %p128
        $region26: #{enhanced_hierarchical_moe_forward.3} parent=23 // pred_check_branch
          %307 = sbr.rel (%p305) target = $region28
        $region27: #{enhanced_hierarchical_moe_forward.3} parent=23 // pred_region
          %s308 = smul.u32 %s32, 16
          %s309 = sadd.s32 %s308, %s33
          %s310 = sld [smem:[#allocation4 + %s309]]
          %s311 = sld [smem:[#allocation3 + %s309]]
          %s312 = smul.u32 %s34, %s311
          %p313 = scmp.lt.s32.totalorder %s310, 15
          %s314 = scalar_select %p313, %s310, 15
          %p315 = scmp.lt.s32.totalorder %s312, 0
          %s316 = scalar_select %p315, %s312, 0
          %s317 = smul.addr %s314, 4
          %s318 = sadd.s32 %s316, %s317
          %s319 = smul.addr %s318, 4
          %s320 = scalar_lea.vmem %s4, %s319
          %s321 = smul.u32 %s32, 16
          %s322 = sadd.s32 %s321, %s33
          %s323 = sld [smem:[#allocation4 + %s322]]
          %s324 = sld [smem:[#allocation3 + %s322]]
          %s325 = smul.u32 %s34, %s324
        $region28: #{enhanced_hierarchical_moe_forward.3} parent=23 // pred_fallthru
          _
        // Predicated region
        $region29: #{enhanced_hierarchical_moe_forward.3} parent=23 // pred_check
          %p326 = pneg %p166
        $region30: #{enhanced_hierarchical_moe_forward.3} parent=23 // pred_check_branch
          %328 = sbr.rel (%p326) target = $region32
        $region31: #{enhanced_hierarchical_moe_forward.3} parent=23 // pred_region
          %s329 = smul.u32 %s32, 16
          %s330 = sadd.s32 %s329, %s33
          %s331 = sld [smem:[#allocation4 + %s330]]
          %s332 = sld [smem:[#allocation3 + %s330]]
          %s333 = smul.u32 %s34, %s332
          %p334 = scmp.lt.s32.totalorder %s331, 15
          %s335 = scalar_select %p334, %s331, 15
          %p336 = scmp.lt.s32.totalorder %s333, 0
          %s337 = scalar_select %p336, %s333, 0
          %s338 = sadd.s32 %s337, %s335
          %s339 = scalar_lea.vmem %s5, %s338
          %s340 = smul.u32 %s32, 16
          %s341 = sadd.s32 %s340, %s33
          %s342 = sld [smem:[#allocation4 + %s341]]
          %s343 = sld [smem:[#allocation3 + %s341]]
          %s344 = smul.u32 %s34, %s343
        $region32: #{enhanced_hierarchical_moe_forward.3} parent=23 // pred_fallthru
          _
        // Predicated region
        $region33: #{enhanced_hierarchical_moe_forward.3} parent=23 // pred_check
          %p345 = pneg %p204
        $region34: #{enhanced_hierarchical_moe_forward.3} parent=23 // pred_check_branch
          %347 = sbr.rel (%p345) target = $region36
        $region35: #{enhanced_hierarchical_moe_forward.3} parent=23 // pred_region
          %s348 = smul.u32 %s32, 16
          %s349 = sadd.s32 %s348, %s33
          %s350 = sld [smem:[#allocation4 + %s349]]
          %s351 = sld [smem:[#allocation3 + %s349]]
          %s352 = smul.u32 %s34, %s351
          %s353 = smul.u32 8, %s352
          %p354 = scmp.lt.s32.totalorder %s350, 15
          %s355 = scalar_select %p354, %s350, 15
          %p356 = scmp.lt.s32.totalorder %s353, 7
          %s357 = scalar_select %p356, %s353, 7
          %s358 = smul.addr %s355, 8
          %s359 = sadd.s32 %s357, %s358
          %s360 = smul.addr %s359, 4
          %s361 = scalar_lea.vmem %s6, %s360
          %s362 = smul.u32 %s32, 16
          %s363 = sadd.s32 %s362, %s33
          %s364 = sld [smem:[#allocation4 + %s363]]
          %s365 = sld [smem:[#allocation3 + %s363]]
          %s366 = smul.u32 %s34, %s365
          %s367 = smul.u32 8, %s366
        $region36: #{enhanced_hierarchical_moe_forward.3} parent=23 // pred_fallthru
          _
        // Predicated region
        $region37: #{enhanced_hierarchical_moe_forward.3} parent=23 // pred_check
          %p368 = pneg %p236
        $region38: #{enhanced_hierarchical_moe_forward.3} parent=23 // pred_check_branch
          %370 = sbr.rel (%p368) target = $region40
        $region39: #{enhanced_hierarchical_moe_forward.3} parent=23 // pred_region
          %s371 = smul.u32 %s32, 16
          %s372 = sadd.s32 %s371, %s33
          %s373 = sld [smem:[#allocation4 + %s372]]
          %p374 = scmp.lt.s32.totalorder %s373, 15
          %s375 = scalar_select %p374, %s373, 15
          %s376 = scalar_lea.vmem %s7, %s375
          %s377 = smul.u32 %s32, 16
          %s378 = sadd.s32 %s377, %s33
          %s379 = sld [smem:[#allocation4 + %s378]]
        $region40: #{enhanced_hierarchical_moe_forward.3} parent=23 // pred_fallthru
          _
      $region24: #{enhanced_hierarchical_moe_forward.3} parent=5 // pred_fallthru
        _
      %p380 = scmp.le.s32.totalorder 1, %s25
      %p381 = scmp.lt.s32.totalorder %s25, 17
      %p382 = pnand %p380, %p381
      %p383 = pneg %p382
      // Predicated region
      $region41: #{enhanced_hierarchical_moe_forward.3} parent=5 // pred_check
        _
      $region42: #{enhanced_hierarchical_moe_forward.3} parent=5 // pred_check_branch
        %385 = sbr.rel (%p382) target = $region44
      $region43: #{enhanced_hierarchical_moe_forward.3} parent=5 // pred_region
        %s386 = ssub.s32 %s25, 1
        %s387 = smul.u32 2, %s35
        %p388 = scmp.lt.s32.totalorder %s387, 1
        %s389 = scalar_select %p388, %s387, 1
        %s390 = smul.addr %s389, 4
        %s391 = scalar_lea.vmem %s2, %s390
        %p392 = pneg %p70
        %p393 = pneg %p67
        %s394 = smul.u32 2, %s35
        %p395 = scmp.lt.s32.totalorder %s394, 1
        %s396 = scalar_select %p395, %s394, 1
        %s397 = smul.addr %s396, 8
        %s398 = scalar_lea.vmem %s3, %s397
        %p399 = pneg %p96
        %p400 = pneg %p93
        %s401 = smul.u32 %s35, 16
        %s402 = sadd.s32 %s401, %s36
        %s403 = sld [smem:[#allocation4 + %s402]]
        %s404 = sld [smem:[#allocation3 + %s402]]
        %s405 = smul.u32 %s37, %s404
        %p406 = scmp.lt.s32.totalorder %s403, 15
        %s407 = scalar_select %p406, %s403, 15
        %p408 = scmp.lt.s32.totalorder %s405, 0
        %s409 = scalar_select %p408, %s405, 0
        %s410 = smul.addr %s407, 4
        %s411 = sadd.s32 %s409, %s410
        %s412 = smul.addr %s411, 4
        %s413 = scalar_lea.vmem %s4, %s412
        %p414 = pneg %p134
        %p415 = pneg %p131
        %s416 = smul.u32 %s35, 16
        %s417 = sadd.s32 %s416, %s36
        %s418 = sld [smem:[#allocation4 + %s417]]
        %s419 = sld [smem:[#allocation3 + %s417]]
        %s420 = smul.u32 %s37, %s419
        %p421 = scmp.lt.s32.totalorder %s418, 15
        %s422 = scalar_select %p421, %s418, 15
        %p423 = scmp.lt.s32.totalorder %s420, 0
        %s424 = scalar_select %p423, %s420, 0
        %s425 = sadd.s32 %s424, %s422
        %s426 = scalar_lea.vmem %s5, %s425
        %p427 = pneg %p172
        %p428 = pneg %p169
        %s429 = smul.u32 %s35, 16
        %s430 = sadd.s32 %s429, %s36
        %s431 = sld [smem:[#allocation4 + %s430]]
        %s432 = sld [smem:[#allocation3 + %s430]]
        %s433 = smul.u32 %s37, %s432
        %s434 = smul.u32 8, %s433
        %p435 = scmp.lt.s32.totalorder %s431, 15
        %s436 = scalar_select %p435, %s431, 15
        %p437 = scmp.lt.s32.totalorder %s434, 7
        %s438 = scalar_select %p437, %s434, 7
        %s439 = smul.addr %s436, 8
        %s440 = sadd.s32 %s438, %s439
        %s441 = smul.addr %s440, 4
        %s442 = scalar_lea.vmem %s6, %s441
        %p443 = pneg %p210
        %p444 = pneg %p207
        %s445 = smul.u32 %s35, 16
        %s446 = sadd.s32 %s445, %s36
        %s447 = sld [smem:[#allocation4 + %s446]]
        %p448 = scmp.lt.s32.totalorder %s447, 15
        %s449 = scalar_select %p448, %s447, 15
        %s450 = scalar_lea.vmem %s7, %s449
        %p451 = pneg %p242
        %p452 = pneg %p239
        %p453 = pneg %p268
        %p454 = pneg %p265
        %s455 = smul.u32 2, %s35
        %p456 = scmp.lt.s32.totalorder %s455, 1
        %s457 = scalar_select %p456, %s455, 1
        %s458 = smul.addr %s457, 4
        %s459 = scalar_lea.vmem %s2, %s458
        %s460 = smul.u32 2, %s35
        %s461 = smul.u32 2, %s35
        %p462 = scmp.lt.s32.totalorder %s461, 1
        %s463 = scalar_select %p462, %s461, 1
        %s464 = smul.addr %s463, 8
        %s465 = scalar_lea.vmem %s3, %s464
        %s466 = smul.u32 2, %s35
        %s467 = smul.u32 %s35, 16
        %s468 = sadd.s32 %s467, %s36
        %s469 = sld [smem:[#allocation4 + %s468]]
        %s470 = sld [smem:[#allocation3 + %s468]]
        %s471 = smul.u32 %s37, %s470
        %p472 = scmp.lt.s32.totalorder %s469, 15
        %s473 = scalar_select %p472, %s469, 15
        %p474 = scmp.lt.s32.totalorder %s471, 0
        %s475 = scalar_select %p474, %s471, 0
        %s476 = smul.addr %s473, 4
        %s477 = sadd.s32 %s475, %s476
        %s478 = smul.addr %s477, 4
        %s479 = scalar_lea.vmem %s4, %s478
        %s480 = smul.u32 %s35, 16
        %s481 = sadd.s32 %s480, %s36
        %s482 = sld [smem:[#allocation4 + %s481]]
        %s483 = sld [smem:[#allocation3 + %s481]]
        %s484 = smul.u32 %s37, %s483
        %s485 = smul.u32 %s35, 16
        %s486 = sadd.s32 %s485, %s36
        %s487 = sld [smem:[#allocation4 + %s486]]
        %s488 = sld [smem:[#allocation3 + %s486]]
        %s489 = smul.u32 %s37, %s488
        %p490 = scmp.lt.s32.totalorder %s487, 15
        %s491 = scalar_select %p490, %s487, 15
        %p492 = scmp.lt.s32.totalorder %s489, 0
        %s493 = scalar_select %p492, %s489, 0
        %s494 = sadd.s32 %s493, %s491
        %s495 = scalar_lea.vmem %s5, %s494
        %s496 = smul.u32 %s35, 16
        %s497 = sadd.s32 %s496, %s36
        %s498 = sld [smem:[#allocation4 + %s497]]
        %s499 = sld [smem:[#allocation3 + %s497]]
        %s500 = smul.u32 %s37, %s499
        %s501 = smul.u32 %s35, 16
        %s502 = sadd.s32 %s501, %s36
        %s503 = sld [smem:[#allocation4 + %s502]]
        %s504 = sld [smem:[#allocation3 + %s502]]
        %s505 = smul.u32 %s37, %s504
        %s506 = smul.u32 8, %s505
        %p507 = scmp.lt.s32.totalorder %s503, 15
        %s508 = scalar_select %p507, %s503, 15
        %p509 = scmp.lt.s32.totalorder %s506, 7
        %s510 = scalar_select %p509, %s506, 7
        %s511 = smul.addr %s508, 8
        %s512 = sadd.s32 %s510, %s511
        %s513 = smul.addr %s512, 4
        %s514 = scalar_lea.vmem %s6, %s513
        %s515 = smul.u32 %s35, 16
        %s516 = sadd.s32 %s515, %s36
        %s517 = sld [smem:[#allocation4 + %s516]]
        %s518 = sld [smem:[#allocation3 + %s516]]
        %s519 = smul.u32 %s37, %s518
        %s520 = smul.u32 8, %s519
        %s521 = smul.u32 %s35, 16
        %s522 = sadd.s32 %s521, %s36
        %s523 = sld [smem:[#allocation4 + %s522]]
        %p524 = scmp.lt.s32.totalorder %s523, 15
        %s525 = scalar_select %p524, %s523, 15
        %s526 = scalar_lea.vmem %s7, %s525
        %s527 = smul.u32 %s35, 16
        %s528 = sadd.s32 %s527, %s36
        %s529 = sld [smem:[#allocation4 + %s528]]
        %s530 = smul.u32 2, %s35
        %p532 = scmp.eq.s32.totalorder %s36, 0
        %p533 = scmp.eq.s32.totalorder %s37, 0
        %p534 = pnand %p532, %p533
        %p535 = pneg %p534
        // Predicated region
        $region45: #{enhanced_hierarchical_moe_forward.3} parent=43 // pred_check
          _
        $region46: #{enhanced_hierarchical_moe_forward.3} parent=43 // pred_check_branch
          %537 = sbr.rel (%p534) target = $region48
        $region47: #{enhanced_hierarchical_moe_forward.3} parent=43 // pred_region
          %vm538 = vcmask 261120
          %539 = vst.msk [vmem:[#allocation5] sm:$0xff] %vm538, 0.0
          %540 = vst.msk [vmem:[#allocation5 + $0x8] sm:$0xff] %vm538, 0.0
        $region48: #{enhanced_hierarchical_moe_forward.3} parent=43 // pred_fallthru
          _
        %s541 = smul.u32 %s35, 16
        %s542 = sadd.s32 %s541, %s36
        %s543 = sld [smem:[#allocation3 + %s542]]
        %p544 = scmp.ne.s32.totalorder %s543, 0
        // Predicated region
        $region49: #{enhanced_hierarchical_moe_forward.3} parent=43 // pred_check
          %p545 = pneg %p544
        $region50: #{enhanced_hierarchical_moe_forward.3} parent=43 // pred_check_branch
          %547 = sbr.rel (%p545) target = $region52
        $region51: #{enhanced_hierarchical_moe_forward.3} parent=43 // pred_region
          %v548 = vld [vmem:[%s459] sm:$0xf]
          %v549 = vld [vmem:[%s459 + $0x4] sm:$0xf]
          %v550 = vld [vmem:[%s479] sm:$0xf]
          %v551 = vld [vmem:[%s479 + $0x4] sm:$0xf]
          %v552 = vld [vmem:[%s479 + $0x8] sm:$0xf]
          %v553 = vld [vmem:[%s479 + $0xc] sm:$0xf]
          %v554 = vld [vmem:[%s495] sm:$0x1]
          %v556 = vlaneseq
          %v557 = vshrl.u32 %v556, 7
          %v558 = vsub.s32 0, %v557
          %v559 = vrot.slane %v554, %v558
          %v563 = vunpack.c.l.b16 %v548
          %v564 = vunpack.c.l.b16 %v549
          %v565 = vpack.c.b16 %v564, %v563
          %v570 = vunpack.c.l.b16 %v550
          %v571 = vunpack.c.l.b16 %v551
          %v572 = vunpack.c.l.b16 %v552
          %v573 = vunpack.c.l.b16 %v553
          %v574 = vpack.c.b16 %v571, %v570
          %v575 = vpack.c.b16 %v573, %v572
          %vm578 = vcmask 261120
          %v580 = vsel %vm578, %v565, 0
          %582 = vmatprep.subr.bf16.mxu0 0
          %583 = vmatpush1.bf16.msra.mxu0 0
          %584 = vmatprep.subr.bf16.mxu0 0
          %585 = vmatpush1.bf16.msra.mxu0 0
          %586 = vmatprep.subr.bf16.mxu0 0
          %587 = vmatpush1.bf16.msra.mxu0 0
          %588 = vmatprep.subr.bf16.mxu0 0
          %589 = vmatpush1.bf16.msra.mxu0 0
          %590 = vmatprep.subr.bf16.mxu0 0
          %591 = vmatpush1.bf16.msra.mxu0 0
          %592 = vmatprep.subr.bf16.mxu0 0
          %593 = vmatpush1.bf16.msra.mxu0 0
          %594 = vmatprep.subr.bf16.mxu0 0
          %595 = vmatpush1.bf16.msra.mxu0 %v575
          %596 = vmatprep.subr.bf16.mxu0 0
          %597 = vmatpush1.bf16.msra.mxu0 %v574
          %598 = vmatprep.subr.bf16.mxu0 0
          %599 = vmatpush2.bf16.msra.mxu0 0
          %600 = vmatprep.subr.bf16.mxu0 0
          %601 = vmatpush2.bf16.msra.mxu0 0
          %602 = vmatprep.subr.bf16.mxu0 0
          %603 = vmatpush2.bf16.msra.mxu0 0
          %604 = vmatprep.subr.bf16.mxu0 0
          %605 = vmatpush2.bf16.msra.mxu0 0
          %606 = vmatprep.subr.bf16.mxu0 0
          %607 = vmatpush2.bf16.msra.mxu0 0
          %608 = vmatprep.subr.bf16.mxu0 0
          %609 = vmatpush2.bf16.msra.mxu0 0
          %610 = vmatprep.subr.bf16.mxu0 0
          %611 = vmatpush2.bf16.msra.mxu0 0
          %612 = vmatprep.subr.bf16.mxu0 0
          %613 = vmatpush2.bf16.msra.mxu0 0
          %614 = vmatprep.mubr.bf16.mxu0 0
          %615 = vmatmul.mubr.bf16.gmra.mxu0 %v580
          %v616 = vpop.f32.mrf.mxu0
          %v617 = vadd.f32 %v559, %v616
          %v618 = vpop.f32.mrf.mxu0
          %v619 = vpop.f32.mrf.mxu0
          %v620 = vadd.f32 %v559, %v619
          %v621 = vpop.f32.mrf.mxu0
          %622 = vdwg.mxu0
          %v623 = vmul.f32 %v617, 0.5
          %v624 = vmul.f32 %v620, 0.5
          %v625 = vmul.f32 %v617, 0.70710677
          %v626 = vmul.f32 %v620, 0.70710677
          %vm627 = vcmp.ge.f32.partialorder %v625, 0.0
          %vm628 = vcmp.ge.f32.partialorder %v626, 0.0
          %v629 = vsel %vm627, 1.0, -1.0
          %v630 = vsel %vm628, 1.0, -1.0
          %v631 = vand.u32 2147483647, %v625
          %v632 = vand.u32 2147483647, %v626
          %v633 = vmul.f32 %v631, 0.3275911
          %v634 = vmul.f32 %v632, 0.3275911
          %v635 = vadd.f32 %v633, 1.0
          %v636 = vadd.f32 %v634, 1.0
          %v637 = vrcp.pop %v635
          %v638 = vmul.f32 1.0, %v637
          %v639 = vrcp.pop %v636
          %v640 = vmul.f32 1.0, %v639
          %v641 = vmul.f32 %v638, 1.0614054
          %v642 = vmul.f32 %v640, 1.0614054
          %v643 = vadd.f32 %v641, -1.4531521
          %v644 = vadd.f32 %v642, -1.4531521
          %v645 = vmul.f32 %v643, %v638
          %v646 = vmul.f32 %v644, %v640
          %v647 = vadd.f32 %v645, 1.4214138
          %v648 = vadd.f32 %v646, 1.4214138
          %v649 = vmul.f32 %v647, %v638
          %v650 = vmul.f32 %v648, %v640
          %v651 = vadd.f32 %v649, -0.28449672
          %v652 = vadd.f32 %v650, -0.28449672
          %v653 = vmul.f32 %v651, %v638
          %v654 = vmul.f32 %v652, %v640
          %v655 = vadd.f32 %v653, 0.2548296
          %v656 = vadd.f32 %v654, 0.2548296
          %v657 = vmul.f32 %v655, %v638
          %v658 = vmul.f32 %v656, %v640
          %v659 = vsub.f32 0.0, %v631
          %v660 = vsub.f32 0.0, %v632
          %v661 = vmul.f32 %v659, %v631
          %v662 = vmul.f32 %v660, %v632
          %v663 = vmul.f32 %v661, 1.442695
          %v664 = vpow.pop %v663
          %v665 = vmul.f32 %v662, 1.442695
          %v666 = vpow.pop %v665
          %v667 = vmul.f32 %v657, %v664
          %v668 = vmul.f32 %v658, %v666
          %v669 = vsub.f32 1.0, %v667
          %v670 = vsub.f32 1.0, %v668
          %v671 = vmul.f32 %v629, %v669
          %v672 = vmul.f32 %v630, %v670
          %v673 = vadd.f32 %v671, 1.0
          %v674 = vadd.f32 %v672, 1.0
          %v675 = vmul.f32 %v623, %v673
          %v676 = vmul.f32 %v624, %v674
          %v677 = vpack.c.bf16 %v676, %v675
          %v678 = vld [vmem:[%s514] sm:$0xf]
          %v679 = vld [vmem:[%s514 + $0x4] sm:$0xf]
          %v680 = vld [vmem:[%s514 + $0x8] sm:$0xf]
          %v681 = vld [vmem:[%s514 + $0xc] sm:$0xf]
          %v682 = vld [vmem:[%s514 + $0x10] sm:$0xf]
          %v683 = vld [vmem:[%s514 + $0x14] sm:$0xf]
          %v684 = vld [vmem:[%s514 + $0x18] sm:$0xf]
          %v685 = vld [vmem:[%s514 + $0x1c] sm:$0xf]
          %s686 = scalar_select %p533, 1, 0
          %s687 = scvt.s32.f32 %s686
          %v688 = vld [vmem:[%s526] sm:$0x1]
          %v689 = vstv %s687
          %v690 = vmul.f32 %v689, %v688
          %v692 = vlaneseq
          %v693 = vshrl.u32 %v692, 7
          %v694 = vsub.s32 0, %v693
          %v695 = vrot.slane %v690, %v694
          %v705 = vunpack.c.l.b16 %v678
          %v706 = vunpack.c.l.b16 %v679
          %v707 = vunpack.c.l.b16 %v680
          %v708 = vunpack.c.l.b16 %v681
          %v709 = vunpack.c.l.b16 %v682
          %v710 = vunpack.c.l.b16 %v683
          %v711 = vunpack.c.l.b16 %v684
          %v712 = vunpack.c.l.b16 %v685
          %v713 = vpack.c.b16 %v706, %v705
          %v714 = vpack.c.b16 %v708, %v707
          %v715 = vpack.c.b16 %v710, %v709
          %v716 = vpack.c.b16 %v712, %v711
          %vm721 = vcmask 523264
          %v723 = vsel %vm721, %v677, 0
          %725 = vmatprep.subr.bf16.mxu0 0
          %726 = vmatpush1.bf16.msra.mxu0 0
          %727 = vmatprep.subr.bf16.mxu0 0
          %728 = vmatpush1.bf16.msra.mxu0 0
          %729 = vmatprep.subr.bf16.mxu0 0
          %730 = vmatpush1.bf16.msra.mxu0 0
          %731 = vmatprep.subr.bf16.mxu0 0
          %732 = vmatpush1.bf16.msra.mxu0 0
          %733 = vmatprep.subr.bf16.mxu0 0
          %734 = vmatpush1.bf16.msra.mxu0 %v716
          %735 = vmatprep.subr.bf16.mxu0 0
          %736 = vmatpush1.bf16.msra.mxu0 %v715
          %737 = vmatprep.subr.bf16.mxu0 0
          %738 = vmatpush1.bf16.msra.mxu0 %v714
          %739 = vmatprep.subr.bf16.mxu0 0
          %740 = vmatpush1.bf16.msra.mxu0 %v713
          %741 = vmatprep.subr.bf16.mxu0 0
          %742 = vmatpush2.bf16.msra.mxu0 0
          %743 = vmatprep.subr.bf16.mxu0 0
          %744 = vmatpush2.bf16.msra.mxu0 0
          %745 = vmatprep.subr.bf16.mxu0 0
          %746 = vmatpush2.bf16.msra.mxu0 0
          %747 = vmatprep.subr.bf16.mxu0 0
          %748 = vmatpush2.bf16.msra.mxu0 0
          %749 = vmatprep.subr.bf16.mxu0 0
          %750 = vmatpush2.bf16.msra.mxu0 0
          %751 = vmatprep.subr.bf16.mxu0 0
          %752 = vmatpush2.bf16.msra.mxu0 0
          %753 = vmatprep.subr.bf16.mxu0 0
          %754 = vmatpush2.bf16.msra.mxu0 0
          %755 = vmatprep.subr.bf16.mxu0 0
          %756 = vmatpush2.bf16.msra.mxu0 0
          %757 = vmatprep.mubr.bf16.mxu0 0
          %758 = vmatmul.mubr.bf16.gmra.mxu0 %v723
          %v759 = vpop.f32.mrf.mxu0
          %v760 = vadd.f32 %v695, %v759
          %v761 = vpop.f32.mrf.mxu0
          %v762 = vpop.f32.mrf.mxu0
          %v763 = vadd.f32 %v695, %v762
          %v764 = vpop.f32.mrf.mxu0
          %765 = vdwg.mxu0
          %v766 = vld [vmem:[%s465] sm:$0xff]
          %v767 = vld [vmem:[%s465 + $0x8] sm:$0xff]
          %v768 = vlaneseq
          %v769 = vand.u32 %v768, 127
          %v770 = vstv %s36
          %vm771 = vcmp.eq.s32.totalorder %v769, %v770
          %v772 = vsel %vm771, %v766, 0.0
          %v773 = vsel %vm771, %v767, 0.0
          %774 = vadd.xlane.f32.xlu0 %v772
          %v775 = vpop.xlane.xlu0 %774
          %776 = vadd.xlane.f32.xlu0 %v773
          %v777 = vpop.xlane.xlu0 %776
          %v778 = vld [vmem:[#allocation5] sm:$0xff]
          %v779 = vld [vmem:[#allocation5 + $0x8] sm:$0xff]
          %v780 = vmul.f32 %v775, %v760
          %v781 = vmul.f32 %v777, %v763
          %v782 = vadd.f32 %v778, %v780
          %v783 = vadd.f32 %v779, %v781
          %784 = vst.msk [vmem:[#allocation5] sm:$0xff] %vm578, %v782
          %785 = vst.msk [vmem:[#allocation5 + $0x8] sm:$0xff] %vm578, %v783
        $region52: #{enhanced_hierarchical_moe_forward.3} parent=43 // pred_fallthru
          _
        // Predicated region
        $region53: #{enhanced_hierarchical_moe_forward.3} parent=43 // pred_check
          %p786 = pneg %p265
        $region54: #{enhanced_hierarchical_moe_forward.3} parent=43 // pred_check_branch
          %788 = sbr.rel (%p786) target = $region56
        $region55: #{enhanced_hierarchical_moe_forward.3} parent=43 // pred_region
          %s789 = smul.u32 2, %s35
          %s791 = ssub.s32 256, 256
          %792 = vsyncadd [#allocation6], %s791
          %s793 = smul.addr %s789, 128
          %s794 = scalar_lea.hbm %s8, %s793
          %s795 = sshll.u32 [#allocation5], 4
          %s796 = int_to_ptr.vmem [resolvable:$true] %s795
          %801 = dma.vmem_to_hbm [thread:$0]  %s796, 256, %s794, [#allocation6], 128, 128, 8
        $region56: #{enhanced_hierarchical_moe_forward.3} parent=43 // pred_fallthru
          _
        // Predicated region
        $region57: #{enhanced_hierarchical_moe_forward.3} parent=43 // pred_check
          %p802 = pneg %p265
        $region58: #{enhanced_hierarchical_moe_forward.3} parent=43 // pred_check_branch
          %804 = sbr.rel (%p802) target = $region60
        $region59: #{enhanced_hierarchical_moe_forward.3} parent=43 // pred_region
          %805 = dma.done [#allocation6], 256
        $region60: #{enhanced_hierarchical_moe_forward.3} parent=43 // pred_fallthru
          _
      $region44: #{enhanced_hierarchical_moe_forward.3} parent=5 // pred_fallthru
        _
      %p806 = scmp.le.s32.totalorder 2, %s25
      // Predicated region
      $region61: #{enhanced_hierarchical_moe_forward.3} parent=5 // pred_check
        %p807 = pneg %p806
      $region62: #{enhanced_hierarchical_moe_forward.3} parent=5 // pred_check_branch
        %809 = sbr.rel (%p807) target = $region64
      $region63: #{enhanced_hierarchical_moe_forward.3} parent=5 // pred_region
        %s810 = ssub.s32 %s25, 2
      $region64: #{enhanced_hierarchical_moe_forward.3} parent=5 // pred_fallthru
        _
    $region6: #{enhanced_hierarchical_moe_forward.3} parent=1 // loop_footer
      %s29 = sadd.s32 1, %s25
    $region7: #{enhanced_hierarchical_moe_forward.3} parent=1 // loop_footer_branch
      %24 = sbr.rel target = $region3
    $region8: #{enhanced_hierarchical_moe_forward.3} parent=1 // loop_exit
      _
    %811 = vsyncpa [#allocation6], 1
    %s812 = scalar_lea.sflag [#allocation6], 1
    %813 = vsyncpa %s812, 1

</llo_original>
